<compile_context>
chip_gen: v7x
topology: tpu7x:2x2x1
jax: 0.10.0
libtpu: 0.0.40
codegen_flags: <defaults>
</compile_context>

<pallas_src>
import functools

import jax
import jax.numpy as jnp
from jax.experimental import pallas as pl
from jax.experimental.pallas import tpu as pltpu

INV_SQRT_2 = 0.7071067811865476
LN_EPS = 1e-6


def _erf_approx(x):
    # Abramowitz & Stegun 7.1.26 rational approximation (max abs err ~1.5e-7),
    # built only from ops Mosaic lowers cheaply (mul/add/exp/where/abs/rcp).
    a1, a2, a3, a4, a5 = 0.254829592, -0.284496736, 1.421413741, -1.453152027, 1.061405429
    p = 0.3275911
    sgn = jnp.where(x >= 0.0, 1.0, -1.0)
    ax = jnp.abs(x)
    t = pl.reciprocal(1.0 + p * ax, approx=True)          # EUP, off the VALU chain
    poly = ((((a5 * t + a4) * t + a3) * t + a2) * t + a1) * t
    return sgn * (1.0 - poly * jnp.exp(-ax * ax))


def conv_ln_gelu_kernel(x_ref, w_ref, b_ref, g_ref, beta_ref, o_ref, *, inv_c):
    """x:(TM,K) bf16  w:(K,CP) bf16  b/g/beta:(1,CP) f32  o:(TM,CP) f32.

    CP is the 128-lane-padded output channel count; inv_c = 1/true_Cout.
    Pad columns of w/b/g/beta are zero, so y is exactly 0 there.
    """
    # Conv as im2col matmul on the MXU, f32 accumulation.
    y = jnp.dot(x_ref[...], w_ref[...], preferred_element_type=jnp.float32) + b_ref[...]

    # channels_first LayerNorm == per-row normalization over the channel dim.
    # Use sums scaled by 1/true_Cout (pad lanes are exactly zero) and
    # var = E[y^2] - mu^2 so the 128-lane padding does not bias the stats.
    s1 = jnp.sum(y, axis=-1, keepdims=True)
    s2 = jnp.sum(y * y, axis=-1, keepdims=True)
    mu = s1 * inv_c
    var = jnp.maximum(s2 * inv_c - mu * mu, 0.0)
    yn = (y - mu) * jax.lax.rsqrt(var + LN_EPS)            # rsqrt -> EUP
    yn = yn * g_ref[...] + beta_ref[...]

    # Exact GELU: 0.5 * x * (1 + erf(x / sqrt(2))).
    o_ref[...] = 0.5 * yn * (1.0 + _erf_approx(yn * INV_SQRT_2))


def _im2col(x_nhwc, k, stride, pad):
    """Plain-JAX glue: extract kxk patches -> (B*Ho*Wo, k*k*Cin), (kh,kw,cin) order."""
    B, H, W, C = x_nhwc.shape
    xp = jnp.pad(x_nhwc, ((0, 0), (pad, pad), (pad, pad), (0, 0)))
    Ho = (H + 2 * pad - k) // stride + 1
    Wo = (W + 2 * pad - k) // stride + 1
    cols = []
    for kh in range(k):
        for kw in range(k):
            cols.append(xp[:, kh:kh + stride * Ho:stride, kw:kw + stride * Wo:stride, :])
    patches = jnp.concatenate(cols, axis=-1)               # (B, Ho, Wo, k*k*C)
    return patches.reshape(B * Ho * Wo, k * k * C), (B, Ho, Wo)


def _choose_tm(M, K, cp):
    """Largest multiple-of-8 row tile that fits a conservative VMEM block budget
    (double-buffered bf16 input rows + f32 padded output rows), capped at 512,
    while keeping >=2 grid steps when possible (v7x dual TensorCore)."""
    per_row = 2 * (K * 2) + 2 * (cp * 4)                   # 2 buffers each, bf16 in / f32 out
    cap = (6 * 1024 * 1024) // per_row                     # ~6 MiB for pipelined blocks
    cap = max(8, min(512, (cap // 8) * 8))
    m8 = ((M + 7) // 8) * 8
    if m8 <= cap:
        if m8 >= 16:
            return max(8, (((m8 + 1) // 2 + 7) // 8) * 8)  # ~2 steps for the whole problem
        return 8
    return cap


def conv_ln_gelu(x_nhwc, w_oihw, b, gamma, beta, *, stride):
    """One fused stage: Conv2d(k=3,p=1,stride) + LayerNorm(channels_first) + GELU."""
    k = w_oihw.shape[-1]
    cout = w_oihw.shape[0]
    patches, (B, Ho, Wo) = _im2col(x_nhwc, k, stride, 1)
    M, K = patches.shape

    # Pad output channels to a multiple of 128 for lane-dense stores.
    CP = ((cout + 127) // 128) * 128
    pad_c = CP - cout

    # Weight (Cout, Cin, kH, kW) -> (kH, kW, Cin, Cout) -> (K, Cout) to match patches.
    w_mat = jnp.transpose(w_oihw, (2, 3, 1, 0)).reshape(K, cout)
    w_mat = jnp.pad(w_mat, ((0, 0), (0, pad_c))).astype(jnp.bfloat16)
    b2 = jnp.pad(b.reshape(1, cout), ((0, 0), (0, pad_c))).astype(jnp.float32)
    g2 = jnp.pad(gamma.reshape(1, cout), ((0, 0), (0, pad_c))).astype(jnp.float32)
    be2 = jnp.pad(beta.reshape(1, cout), ((0, 0), (0, pad_c))).astype(jnp.float32)

    # bf16 for the dominant HBM stream; accumulation stays f32 in the kernel.
    patches = patches.astype(jnp.bfloat16)

    TM = _choose_tm(M, K, CP)
    grid_m = pl.cdiv(M, TM)

    # Explicit VMEM budget (double-buffered blocks + resident weights), clamped
    # to a value that is safe on v5e/v6e (128 MiB) and v7x (64 MiB physical).
    vmem_need = 2 * TM * K * 2 + 2 * TM * CP * 4 + 2 * K * CP * 2 + 6 * CP * 4
    vmem_limit = int(min(32 * 1024 * 1024, max(16 * 1024 * 1024, 4 * vmem_need)))

    kernel = functools.partial(conv_ln_gelu_kernel, inv_c=1.0 / float(cout))

    out = pl.pallas_call(
        kernel,
        out_shape=jax.ShapeDtypeStruct((M, CP), jnp.float32),
        grid_spec=pltpu.PrefetchScalarGridSpec(
            num_scalar_prefetch=0,
            grid=(grid_m,),
            in_specs=[
                pl.BlockSpec((TM, K), lambda i: (i, 0)),
                pl.BlockSpec((K, CP), lambda i: (0, 0)),
                pl.BlockSpec((1, CP), lambda i: (0, 0)),
                pl.BlockSpec((1, CP), lambda i: (0, 0)),
                pl.BlockSpec((1, CP), lambda i: (0, 0)),
            ],
            out_specs=pl.BlockSpec((TM, CP), lambda i: (i, 0)),
        ),
        compiler_params=pltpu.CompilerParams(
            dimension_semantics=("parallel",),
            vmem_limit_bytes=vmem_limit,
        ),
    )(patches, w_mat, b2, g2, be2)

    # Drop the zero pad lanes and restore the spatial layout.
    return out[:, :cout].reshape(B, Ho, Wo, cout)


def make_params(key, siz):
    """Deterministic synthetic params matching ConvBlock3.__init__ shapes."""
    c1, c2, c3 = siz, int(siz * 1.5), siz * 2
    chans = [(3, c1), (c1, c2), (c2, c3)]
    params = []
    for (cin, cout) in chans:
        key, kw, kb = jax.random.split(key, 3)
        w = jax.random.normal(kw, (cout, cin, 3, 3), jnp.float32) * 0.05
        b = jax.random.normal(kb, (cout,), jnp.float32) * 0.01
        gamma = jnp.ones((cout,), jnp.float32)   # LayerNorm weight init (ones)
        beta = jnp.zeros((cout,), jnp.float32)   # LayerNorm bias init (zeros)
        params.append((w, b, gamma, beta))
    return params


@jax.jit
def convblock3_forward(x_nchw, params):
    # NCHW -> NHWC once; all three stages stay NHWC (no per-stage transposes).
    x = jnp.transpose(x_nchw, (0, 2, 3, 1))
    strides = (2, 2, 1)
    for (w, b, g, be), s in zip(params, strides):
        x = conv_ln_gelu(x, w, b, g, be, stride=s)
    # Back to NCHW like the PyTorch module output.
    return jnp.transpose(x, (0, 3, 1, 2))


if __name__ == "__main__":
    key = jax.random.PRNGKey(0)
    key, kx = jax.random.split(key)
    siz = 8  # small "planes" -> channels 3 -> 8 -> 12 -> 16
    x = jax.random.normal(kx, (2, 3, 16, 16), jnp.float32)  # NCHW like PyTorch
    params = make_params(key, siz)

    out = convblock3_forward(x, params)
    jax.block_until_ready(out)
    assert out.shape == (2, 2 * siz, 4, 4), out.shape  # 16x16 -> /2 -> /2 -> same
    print("KERNEL_OK")
</pallas_src>

<mosaic_0001>
module attributes {stable_mosaic.version = 11 : i64} {
  func.func @conv_ln_gelu_kernel(%arg0: i32, %arg1: memref<64x27xbf16, #tpu.memory_space<vmem>>, %arg2: memref<27x128xbf16, #tpu.memory_space<vmem>>, %arg3: memref<1x128xf32, #tpu.memory_space<vmem>>, %arg4: memref<1x128xf32, #tpu.memory_space<vmem>>, %arg5: memref<1x128xf32, #tpu.memory_space<vmem>>, %arg6: memref<64x128xf32, #tpu.memory_space<vmem>>) attributes {dimension_semantics = [#tpu.dimension_semantics<parallel>], iteration_bounds = array<i64: 2>, scalar_prefetch = 0 : i64, scratch_operands = 0 : i64, tpu.core_type = #tpu.core_type<tc>, window_params = [{transform_indices = @transform_0, window_bounds = array<i64: 64, 27>}, {pipeline_mode = #tpu.pipeline_mode<synchronous>, transform_indices = @transform_1, window_bounds = array<i64: 27, 128>}, {pipeline_mode = #tpu.pipeline_mode<synchronous>, transform_indices = @transform_2, window_bounds = array<i64: 1, 128>}, {pipeline_mode = #tpu.pipeline_mode<synchronous>, transform_indices = @transform_3, window_bounds = array<i64: 1, 128>}, {pipeline_mode = #tpu.pipeline_mode<synchronous>, transform_indices = @transform_4, window_bounds = array<i64: 1, 128>}, {transform_indices = @transform_5, window_bounds = array<i64: 64, 128>}]} {
    %c0 = arith.constant 0 : index
    %c0_0 = arith.constant 0 : index
    %0 = vector.load %arg1[%c0, %c0_0] : memref<64x27xbf16, #tpu.memory_space<vmem>>, vector<64x27xbf16>
    %c0_1 = arith.constant 0 : index
    %c0_2 = arith.constant 0 : index
    %1 = vector.load %arg2[%c0_1, %c0_2] : memref<27x128xbf16, #tpu.memory_space<vmem>>, vector<27x128xbf16>
    %cst = arith.constant dense<0.000000e+00> : vector<64x128xf32>
    %2 = tpu.matmul %0, %1, %cst {dimension_numbers = #tpu.dot_dimension_numbers<[1], [0], [0], [1], [0, 0, 1, 1], [], []>} : vector<64x27xbf16>, vector<27x128xbf16>, vector<64x128xf32> -> vector<64x128xf32>
    %c0_3 = arith.constant 0 : index
    %c0_4 = arith.constant 0 : index
    %3 = vector.load %arg3[%c0_3, %c0_4] : memref<1x128xf32, #tpu.memory_space<vmem>>, vector<1x128xf32>
    %4 = vector.broadcast %3 : vector<1x128xf32> to vector<64x128xf32>
    %5 = arith.addf %2, %4 : vector<64x128xf32>
    %cst_5 = arith.constant dense<0.000000e+00> : vector<64xf32>
    %6 = vector.multi_reduction <add>, %5, %cst_5 [1] : vector<64x128xf32> to vector<64xf32>
    %7 = vector.shape_cast %6 : vector<64xf32> to vector<64x1xf32>
    %8 = arith.mulf %5, %5 : vector<64x128xf32>
    %cst_6 = arith.constant dense<0.000000e+00> : vector<64xf32>
    %9 = vector.multi_reduction <add>, %8, %cst_6 [1] : vector<64x128xf32> to vector<64xf32>
    %10 = vector.shape_cast %9 : vector<64xf32> to vector<64x1xf32>
    %cst_7 = arith.constant 1.250000e-01 : f32
    %11 = vector.broadcast %cst_7 : f32 to vector<64x1xf32>
    %12 = arith.mulf %7, %11 : vector<64x1xf32>
    %cst_8 = arith.constant 1.250000e-01 : f32
    %13 = vector.broadcast %cst_8 : f32 to vector<64x1xf32>
    %14 = arith.mulf %10, %13 : vector<64x1xf32>
    %15 = arith.mulf %12, %12 : vector<64x1xf32>
    %16 = arith.subf %14, %15 : vector<64x1xf32>
    %cst_9 = arith.constant 0.000000e+00 : f32
    %17 = vector.broadcast %cst_9 : f32 to vector<64x1xf32>
    %18 = arith.maximumf %16, %17 : vector<64x1xf32>
    %19 = vector.broadcast %12 : vector<64x1xf32> to vector<64x128xf32>
    %20 = arith.subf %5, %19 : vector<64x128xf32>
    %cst_10 = arith.constant 9.99999997E-7 : f32
    %21 = vector.broadcast %cst_10 : f32 to vector<64x1xf32>
    %22 = arith.addf %18, %21 : vector<64x1xf32>
    %23 = math.rsqrt %22 : vector<64x1xf32>
    %24 = vector.broadcast %23 : vector<64x1xf32> to vector<64x128xf32>
    %25 = arith.mulf %20, %24 : vector<64x128xf32>
    %c0_11 = arith.constant 0 : index
    %c0_12 = arith.constant 0 : index
    %26 = vector.load %arg4[%c0_11, %c0_12] : memref<1x128xf32, #tpu.memory_space<vmem>>, vector<1x128xf32>
    %27 = vector.broadcast %26 : vector<1x128xf32> to vector<64x128xf32>
    %28 = arith.mulf %25, %27 : vector<64x128xf32>
    %c0_13 = arith.constant 0 : index
    %c0_14 = arith.constant 0 : index
    %29 = vector.load %arg5[%c0_13, %c0_14] : memref<1x128xf32, #tpu.memory_space<vmem>>, vector<1x128xf32>
    %30 = vector.broadcast %29 : vector<1x128xf32> to vector<64x128xf32>
    %31 = arith.addf %28, %30 : vector<64x128xf32>
    %cst_15 = arith.constant 5.000000e-01 : f32
    %32 = vector.broadcast %cst_15 : f32 to vector<64x128xf32>
    %33 = arith.mulf %32, %31 : vector<64x128xf32>
    %cst_16 = arith.constant 0.707106769 : f32
    %34 = vector.broadcast %cst_16 : f32 to vector<64x128xf32>
    %35 = arith.mulf %31, %34 : vector<64x128xf32>
    %cst_17 = arith.constant 0.000000e+00 : f32
    %36 = vector.broadcast %cst_17 : f32 to vector<64x128xf32>
    %37 = arith.cmpf oge, %35, %36 : vector<64x128xf32>
    %cst_18 = arith.constant 1.000000e+00 : f32
    %cst_19 = arith.constant -1.000000e+00 : f32
    %38 = vector.broadcast %cst_18 : f32 to vector<64x128xf32>
    %39 = vector.broadcast %cst_19 : f32 to vector<64x128xf32>
    %40 = arith.select %37, %38, %39 : vector<64x128xi1>, vector<64x128xf32>
    %41 = math.absf %35 : vector<64x128xf32>
    %cst_20 = arith.constant 0.327591091 : f32
    %42 = vector.broadcast %cst_20 : f32 to vector<64x128xf32>
    %43 = arith.mulf %42, %41 : vector<64x128xf32>
    %cst_21 = arith.constant 1.000000e+00 : f32
    %44 = vector.broadcast %cst_21 : f32 to vector<64x128xf32>
    %45 = arith.addf %44, %43 : vector<64x128xf32>
    %46 = tpu.reciprocal %45 {approx = true} : vector<64x128xf32> -> vector<64x128xf32>
    %cst_22 = arith.constant 1.06140542 : f32
    %47 = vector.broadcast %cst_22 : f32 to vector<64x128xf32>
    %48 = arith.mulf %47, %46 : vector<64x128xf32>
    %cst_23 = arith.constant -1.45315206 : f32
    %49 = vector.broadcast %cst_23 : f32 to vector<64x128xf32>
    %50 = arith.addf %48, %49 : vector<64x128xf32>
    %51 = arith.mulf %50, %46 : vector<64x128xf32>
    %cst_24 = arith.constant 1.42141378 : f32
    %52 = vector.broadcast %cst_24 : f32 to vector<64x128xf32>
    %53 = arith.addf %51, %52 : vector<64x128xf32>
    %54 = arith.mulf %53, %46 : vector<64x128xf32>
    %cst_25 = arith.constant -0.284496725 : f32
    %55 = vector.broadcast %cst_25 : f32 to vector<64x128xf32>
    %56 = arith.addf %54, %55 : vector<64x128xf32>
    %57 = arith.mulf %56, %46 : vector<64x128xf32>
    %cst_26 = arith.constant 0.254829586 : f32
    %58 = vector.broadcast %cst_26 : f32 to vector<64x128xf32>
    %59 = arith.addf %57, %58 : vector<64x128xf32>
    %60 = arith.mulf %59, %46 : vector<64x128xf32>
    %cst_27 = arith.constant 0.000000e+00 : f32
    %61 = vector.broadcast %cst_27 : f32 to vector<64x128xf32>
    %62 = arith.subf %61, %41 : vector<64x128xf32>
    %63 = arith.mulf %62, %41 : vector<64x128xf32>
    %64 = math.exp %63 : vector<64x128xf32>
    %65 = arith.mulf %60, %64 : vector<64x128xf32>
    %cst_28 = arith.constant 1.000000e+00 : f32
    %66 = vector.broadcast %cst_28 : f32 to vector<64x128xf32>
    %67 = arith.subf %66, %65 : vector<64x128xf32>
    %68 = arith.mulf %40, %67 : vector<64x128xf32>
    %cst_29 = arith.constant 1.000000e+00 : f32
    %69 = vector.broadcast %cst_29 : f32 to vector<64x128xf32>
    %70 = arith.addf %69, %68 : vector<64x128xf32>
    %71 = arith.mulf %33, %70 : vector<64x128xf32>
    %c0_30 = arith.constant 0 : index
    %c0_31 = arith.constant 0 : index
    %72 = vector.load %arg6[%c0_30, %c0_31] : memref<64x128xf32, #tpu.memory_space<vmem>>, vector<64x128xf32>
    tpu.vector_store %arg6[%c0_30, %c0_31], %71 {strides = array<i32>} : memref<64x128xf32, #tpu.memory_space<vmem>>, vector<64x128xf32>,
    return
  }
  func.func @transform_0(%arg0: i32) -> (i32, i32) {
    %c0_i32 = arith.constant 0 : i32
    %c0_i32_0 = arith.constant 0 : i32
    return %arg0, %c0_i32 : i32, i32
  }
  func.func @transform_1(%arg0: i32) -> (i32, i32) {
    %c0_i32 = arith.constant 0 : i32
    %c0_i32_0 = arith.constant 0 : i32
    %c0_i32_1 = arith.constant 0 : i32
    return %c0_i32, %c0_i32_0 : i32, i32
  }
  func.func @transform_2(%arg0: i32) -> (i32, i32) {
    %c0_i32 = arith.constant 0 : i32
    %c0_i32_0 = arith.constant 0 : i32
    %c0_i32_1 = arith.constant 0 : i32
    return %c0_i32, %c0_i32_0 : i32, i32
  }
  func.func @transform_3(%arg0: i32) -> (i32, i32) {
    %c0_i32 = arith.constant 0 : i32
    %c0_i32_0 = arith.constant 0 : i32
    %c0_i32_1 = arith.constant 0 : i32
    return %c0_i32, %c0_i32_0 : i32, i32
  }
  func.func @transform_4(%arg0: i32) -> (i32, i32) {
    %c0_i32 = arith.constant 0 : i32
    %c0_i32_0 = arith.constant 0 : i32
    %c0_i32_1 = arith.constant 0 : i32
    return %c0_i32, %c0_i32_0 : i32, i32
  }
  func.func @transform_5(%arg0: i32) -> (i32, i32) {
    %c0_i32 = arith.constant 0 : i32
    %c0_i32_0 = arith.constant 0 : i32
    return %arg0, %c0_i32 : i32, i32
  }
}

module attributes {stable_mosaic.version = 11 : i64} {
  func.func @conv_ln_gelu_kernel(%arg0: i32, %arg1: memref<16x72xbf16, #tpu.memory_space<vmem>>, %arg2: memref<72x128xbf16, #tpu.memory_space<vmem>>, %arg3: memref<1x128xf32, #tpu.memory_space<vmem>>, %arg4: memref<1x128xf32, #tpu.memory_space<vmem>>, %arg5: memref<1x128xf32, #tpu.memory_space<vmem>>, %arg6: memref<16x128xf32, #tpu.memory_space<vmem>>) attributes {dimension_semantics = [#tpu.dimension_semantics<parallel>], iteration_bounds = array<i64: 2>, scalar_prefetch = 0 : i64, scratch_operands = 0 : i64, tpu.core_type = #tpu.core_type<tc>, window_params = [{transform_indices = @transform_0, window_bounds = array<i64: 16, 72>}, {pipeline_mode = #tpu.pipeline_mode<synchronous>, transform_indices = @transform_1, window_bounds = array<i64: 72, 128>}, {pipeline_mode = #tpu.pipeline_mode<synchronous>, transform_indices = @transform_2, window_bounds = array<i64: 1, 128>}, {pipeline_mode = #tpu.pipeline_mode<synchronous>, transform_indices = @transform_3, window_bounds = array<i64: 1, 128>}, {pipeline_mode = #tpu.pipeline_mode<synchronous>, transform_indices = @transform_4, window_bounds = array<i64: 1, 128>}, {transform_indices = @transform_5, window_bounds = array<i64: 16, 128>}]} {
    %c0 = arith.constant 0 : index
    %c0_0 = arith.constant 0 : index
    %0 = vector.load %arg1[%c0, %c0_0] : memref<16x72xbf16, #tpu.memory_space<vmem>>, vector<16x72xbf16>
    %c0_1 = arith.constant 0 : index
    %c0_2 = arith.constant 0 : index
    %1 = vector.load %arg2[%c0_1, %c0_2] : memref<72x128xbf16, #tpu.memory_space<vmem>>, vector<72x128xbf16>
    %cst = arith.constant dense<0.000000e+00> : vector<16x128xf32>
    %2 = tpu.matmul %0, %1, %cst {dimension_numbers = #tpu.dot_dimension_numbers<[1], [0], [0], [1], [0, 0, 1, 1], [], []>} : vector<16x72xbf16>, vector<72x128xbf16>, vector<16x128xf32> -> vector<16x128xf32>
    %c0_3 = arith.constant 0 : index
    %c0_4 = arith.constant 0 : index
    %3 = vector.load %arg3[%c0_3, %c0_4] : memref<1x128xf32, #tpu.memory_space<vmem>>, vector<1x128xf32>
    %4 = vector.broadcast %3 : vector<1x128xf32> to vector<16x128xf32>
    %5 = arith.addf %2, %4 : vector<16x128xf32>
    %cst_5 = arith.constant dense<0.000000e+00> : vector<16xf32>
    %6 = vector.multi_reduction <add>, %5, %cst_5 [1] : vector<16x128xf32> to vector<16xf32>
    %7 = vector.shape_cast %6 : vector<16xf32> to vector<16x1xf32>
    %8 = arith.mulf %5, %5 : vector<16x128xf32>
    %cst_6 = arith.constant dense<0.000000e+00> : vector<16xf32>
    %9 = vector.multi_reduction <add>, %8, %cst_6 [1] : vector<16x128xf32> to vector<16xf32>
    %10 = vector.shape_cast %9 : vector<16xf32> to vector<16x1xf32>
    %cst_7 = arith.constant 0.0833333358 : f32
    %11 = vector.broadcast %cst_7 : f32 to vector<16x1xf32>
    %12 = arith.mulf %7, %11 : vector<16x1xf32>
    %cst_8 = arith.constant 0.0833333358 : f32
    %13 = vector.broadcast %cst_8 : f32 to vector<16x1xf32>
    %14 = arith.mulf %10, %13 : vector<16x1xf32>
    %15 = arith.mulf %12, %12 : vector<16x1xf32>
    %16 = arith.subf %14, %15 : vector<16x1xf32>
    %cst_9 = arith.constant 0.000000e+00 : f32
    %17 = vector.broadcast %cst_9 : f32 to vector<16x1xf32>
    %18 = arith.maximumf %16, %17 : vector<16x1xf32>
    %19 = vector.broadcast %12 : vector<16x1xf32> to vector<16x128xf32>
    %20 = arith.subf %5, %19 : vector<16x128xf32>
    %cst_10 = arith.constant 9.99999997E-7 : f32
    %21 = vector.broadcast %cst_10 : f32 to vector<16x1xf32>
    %22 = arith.addf %18, %21 : vector<16x1xf32>
    %23 = math.rsqrt %22 : vector<16x1xf32>
    %24 = vector.broadcast %23 : vector<16x1xf32> to vector<16x128xf32>
    %25 = arith.mulf %20, %24 : vector<16x128xf32>
    %c0_11 = arith.constant 0 : index
    %c0_12 = arith.constant 0 : index
    %26 = vector.load %arg4[%c0_11, %c0_12] : memref<1x128xf32, #tpu.memory_space<vmem>>, vector<1x128xf32>
    %27 = vector.broadcast %26 : vector<1x128xf32> to vector<16x128xf32>
    %28 = arith.mulf %25, %27 : vector<16x128xf32>
    %c0_13 = arith.constant 0 : index
    %c0_14 = arith.constant 0 : index
    %29 = vector.load %arg5[%c0_13, %c0_14] : memref<1x128xf32, #tpu.memory_space<vmem>>, vector<1x128xf32>
    %30 = vector.broadcast %29 : vector<1x128xf32> to vector<16x128xf32>
    %31 = arith.addf %28, %30 : vector<16x128xf32>
    %cst_15 = arith.constant 5.000000e-01 : f32
    %32 = vector.broadcast %cst_15 : f32 to vector<16x128xf32>
    %33 = arith.mulf %32, %31 : vector<16x128xf32>
    %cst_16 = arith.constant 0.707106769 : f32
    %34 = vector.broadcast %cst_16 : f32 to vector<16x128xf32>
    %35 = arith.mulf %31, %34 : vector<16x128xf32>
    %cst_17 = arith.constant 0.000000e+00 : f32
    %36 = vector.broadcast %cst_17 : f32 to vector<16x128xf32>
    %37 = arith.cmpf oge, %35, %36 : vector<16x128xf32>
    %cst_18 = arith.constant 1.000000e+00 : f32
    %cst_19 = arith.constant -1.000000e+00 : f32
    %38 = vector.broadcast %cst_18 : f32 to vector<16x128xf32>
    %39 = vector.broadcast %cst_19 : f32 to vector<16x128xf32>
    %40 = arith.select %37, %38, %39 : vector<16x128xi1>, vector<16x128xf32>
    %41 = math.absf %35 : vector<16x128xf32>
    %cst_20 = arith.constant 0.327591091 : f32
    %42 = vector.broadcast %cst_20 : f32 to vector<16x128xf32>
    %43 = arith.mulf %42, %41 : vector<16x128xf32>
    %cst_21 = arith.constant 1.000000e+00 : f32
    %44 = vector.broadcast %cst_21 : f32 to vector<16x128xf32>
    %45 = arith.addf %44, %43 : vector<16x128xf32>
    %46 = tpu.reciprocal %45 {approx = true} : vector<16x128xf32> -> vector<16x128xf32>
    %cst_22 = arith.constant 1.06140542 : f32
    %47 = vector.broadcast %cst_22 : f32 to vector<16x128xf32>
    %48 = arith.mulf %47, %46 : vector<16x128xf32>
    %cst_23 = arith.constant -1.45315206 : f32
    %49 = vector.broadcast %cst_23 : f32 to vector<16x128xf32>
    %50 = arith.addf %48, %49 : vector<16x128xf32>
    %51 = arith.mulf %50, %46 : vector<16x128xf32>
    %cst_24 = arith.constant 1.42141378 : f32
    %52 = vector.broadcast %cst_24 : f32 to vector<16x128xf32>
    %53 = arith.addf %51, %52 : vector<16x128xf32>
    %54 = arith.mulf %53, %46 : vector<16x128xf32>
    %cst_25 = arith.constant -0.284496725 : f32
    %55 = vector.broadcast %cst_25 : f32 to vector<16x128xf32>
    %56 = arith.addf %54, %55 : vector<16x128xf32>
    %57 = arith.mulf %56, %46 : vector<16x128xf32>
    %cst_26 = arith.constant 0.254829586 : f32
    %58 = vector.broadcast %cst_26 : f32 to vector<16x128xf32>
    %59 = arith.addf %57, %58 : vector<16x128xf32>
    %60 = arith.mulf %59, %46 : vector<16x128xf32>
    %cst_27 = arith.constant 0.000000e+00 : f32
    %61 = vector.broadcast %cst_27 : f32 to vector<16x128xf32>
    %62 = arith.subf %61, %41 : vector<16x128xf32>
    %63 = arith.mulf %62, %41 : vector<16x128xf32>
    %64 = math.exp %63 : vector<16x128xf32>
    %65 = arith.mulf %60, %64 : vector<16x128xf32>
    %cst_28 = arith.constant 1.000000e+00 : f32
    %66 = vector.broadcast %cst_28 : f32 to vector<16x128xf32>
    %67 = arith.subf %66, %65 : vector<16x128xf32>
    %68 = arith.mulf %40, %67 : vector<16x128xf32>
    %cst_29 = arith.constant 1.000000e+00 : f32
    %69 = vector.broadcast %cst_29 : f32 to vector<16x128xf32>
    %70 = arith.addf %69, %68 : vector<16x128xf32>
    %71 = arith.mulf %33, %70 : vector<16x128xf32>
    %c0_30 = arith.constant 0 : index
    %c0_31 = arith.constant 0 : index
    %72 = vector.load %arg6[%c0_30, %c0_31] : memref<16x128xf32, #tpu.memory_space<vmem>>, vector<16x128xf32>
    tpu.vector_store %arg6[%c0_30, %c0_31], %71 {strides = array<i32>} : memref<16x128xf32, #tpu.memory_space<vmem>>, vector<16x128xf32>,
    return
  }
  func.func @transform_0(%arg0: i32) -> (i32, i32) {
    %c0_i32 = arith.constant 0 : i32
    %c0_i32_0 = arith.constant 0 : i32
    return %arg0, %c0_i32 : i32, i32
  }
  func.func @transform_1(%arg0: i32) -> (i32, i32) {
    %c0_i32 = arith.constant 0 : i32
    %c0_i32_0 = arith.constant 0 : i32
    %c0_i32_1 = arith.constant 0 : i32
    return %c0_i32, %c0_i32_0 : i32, i32
  }
  func.func @transform_2(%arg0: i32) -> (i32, i32) {
    %c0_i32 = arith.constant 0 : i32
    %c0_i32_0 = arith.constant 0 : i32
    %c0_i32_1 = arith.constant 0 : i32
    return %c0_i32, %c0_i32_0 : i32, i32
  }
  func.func @transform_3(%arg0: i32) -> (i32, i32) {
    %c0_i32 = arith.constant 0 : i32
    %c0_i32_0 = arith.constant 0 : i32
    %c0_i32_1 = arith.constant 0 : i32
    return %c0_i32, %c0_i32_0 : i32, i32
  }
  func.func @transform_4(%arg0: i32) -> (i32, i32) {
    %c0_i32 = arith.constant 0 : i32
    %c0_i32_0 = arith.constant 0 : i32
    %c0_i32_1 = arith.constant 0 : i32
    return %c0_i32, %c0_i32_0 : i32, i32
  }
  func.func @transform_5(%arg0: i32) -> (i32, i32) {
    %c0_i32 = arith.constant 0 : i32
    %c0_i32_0 = arith.constant 0 : i32
    return %arg0, %c0_i32 : i32, i32
  }
}

module attributes {stable_mosaic.version = 11 : i64} {
  func.func @conv_ln_gelu_kernel(%arg0: i32, %arg1: memref<16x108xbf16, #tpu.memory_space<vmem>>, %arg2: memref<108x128xbf16, #tpu.memory_space<vmem>>, %arg3: memref<1x128xf32, #tpu.memory_space<vmem>>, %arg4: memref<1x128xf32, #tpu.memory_space<vmem>>, %arg5: memref<1x128xf32, #tpu.memory_space<vmem>>, %arg6: memref<16x128xf32, #tpu.memory_space<vmem>>) attributes {dimension_semantics = [#tpu.dimension_semantics<parallel>], iteration_bounds = array<i64: 2>, scalar_prefetch = 0 : i64, scratch_operands = 0 : i64, tpu.core_type = #tpu.core_type<tc>, window_params = [{transform_indices = @transform_0, window_bounds = array<i64: 16, 108>}, {pipeline_mode = #tpu.pipeline_mode<synchronous>, transform_indices = @transform_1, window_bounds = array<i64: 108, 128>}, {pipeline_mode = #tpu.pipeline_mode<synchronous>, transform_indices = @transform_2, window_bounds = array<i64: 1, 128>}, {pipeline_mode = #tpu.pipeline_mode<synchronous>, transform_indices = @transform_3, window_bounds = array<i64: 1, 128>}, {pipeline_mode = #tpu.pipeline_mode<synchronous>, transform_indices = @transform_4, window_bounds = array<i64: 1, 128>}, {transform_indices = @transform_5, window_bounds = array<i64: 16, 128>}]} {
    %c0 = arith.constant 0 : index
    %c0_0 = arith.constant 0 : index
    %0 = vector.load %arg1[%c0, %c0_0] : memref<16x108xbf16, #tpu.memory_space<vmem>>, vector<16x108xbf16>
    %c0_1 = arith.constant 0 : index
    %c0_2 = arith.constant 0 : index
    %1 = vector.load %arg2[%c0_1, %c0_2] : memref<108x128xbf16, #tpu.memory_space<vmem>>, vector<108x128xbf16>
    %cst = arith.constant dense<0.000000e+00> : vector<16x128xf32>
    %2 = tpu.matmul %0, %1, %cst {dimension_numbers = #tpu.dot_dimension_numbers<[1], [0], [0], [1], [0, 0, 1, 1], [], []>} : vector<16x108xbf16>, vector<108x128xbf16>, vector<16x128xf32> -> vector<16x128xf32>
    %c0_3 = arith.constant 0 : index
    %c0_4 = arith.constant 0 : index
    %3 = vector.load %arg3[%c0_3, %c0_4] : memref<1x128xf32, #tpu.memory_space<vmem>>, vector<1x128xf32>
    %4 = vector.broadcast %3 : vector<1x128xf32> to vector<16x128xf32>
    %5 = arith.addf %2, %4 : vector<16x128xf32>
    %cst_5 = arith.constant dense<0.000000e+00> : vector<16xf32>
    %6 = vector.multi_reduction <add>, %5, %cst_5 [1] : vector<16x128xf32> to vector<16xf32>
    %7 = vector.shape_cast %6 : vector<16xf32> to vector<16x1xf32>
    %8 = arith.mulf %5, %5 : vector<16x128xf32>
    %cst_6 = arith.constant dense<0.000000e+00> : vector<16xf32>
    %9 = vector.multi_reduction <add>, %8, %cst_6 [1] : vector<16x128xf32> to vector<16xf32>
    %10 = vector.shape_cast %9 : vector<16xf32> to vector<16x1xf32>
    %cst_7 = arith.constant 6.250000e-02 : f32
    %11 = vector.broadcast %cst_7 : f32 to vector<16x1xf32>
    %12 = arith.mulf %7, %11 : vector<16x1xf32>
    %cst_8 = arith.constant 6.250000e-02 : f32
    %13 = vector.broadcast %cst_8 : f32 to vector<16x1xf32>
    %14 = arith.mulf %10, %13 : vector<16x1xf32>
    %15 = arith.mulf %12, %12 : vector<16x1xf32>
    %16 = arith.subf %14, %15 : vector<16x1xf32>
    %cst_9 = arith.constant 0.000000e+00 : f32
    %17 = vector.broadcast %cst_9 : f32 to vector<16x1xf32>
    %18 = arith.maximumf %16, %17 : vector<16x1xf32>
    %19 = vector.broadcast %12 : vector<16x1xf32> to vector<16x128xf32>
    %20 = arith.subf %5, %19 : vector<16x128xf32>
    %cst_10 = arith.constant 9.99999997E-7 : f32
    %21 = vector.broadcast %cst_10 : f32 to vector<16x1xf32>
    %22 = arith.addf %18, %21 : vector<16x1xf32>
    %23 = math.rsqrt %22 : vector<16x1xf32>
    %24 = vector.broadcast %23 : vector<16x1xf32> to vector<16x128xf32>
    %25 = arith.mulf %20, %24 : vector<16x128xf32>
    %c0_11 = arith.constant 0 : index
    %c0_12 = arith.constant 0 : index
    %26 = vector.load %arg4[%c0_11, %c0_12] : memref<1x128xf32, #tpu.memory_space<vmem>>, vector<1x128xf32>
    %27 = vector.broadcast %26 : vector<1x128xf32> to vector<16x128xf32>
    %28 = arith.mulf %25, %27 : vector<16x128xf32>
    %c0_13 = arith.constant 0 : index
    %c0_14 = arith.constant 0 : index
    %29 = vector.load %arg5[%c0_13, %c0_14] : memref<1x128xf32, #tpu.memory_space<vmem>>, vector<1x128xf32>
    %30 = vector.broadcast %29 : vector<1x128xf32> to vector<16x128xf32>
    %31 = arith.addf %28, %30 : vector<16x128xf32>
    %cst_15 = arith.constant 5.000000e-01 : f32
    %32 = vector.broadcast %cst_15 : f32 to vector<16x128xf32>
    %33 = arith.mulf %32, %31 : vector<16x128xf32>
    %cst_16 = arith.constant 0.707106769 : f32
    %34 = vector.broadcast %cst_16 : f32 to vector<16x128xf32>
    %35 = arith.mulf %31, %34 : vector<16x128xf32>
    %cst_17 = arith.constant 0.000000e+00 : f32
    %36 = vector.broadcast %cst_17 : f32 to vector<16x128xf32>
    %37 = arith.cmpf oge, %35, %36 : vector<16x128xf32>
    %cst_18 = arith.constant 1.000000e+00 : f32
    %cst_19 = arith.constant -1.000000e+00 : f32
    %38 = vector.broadcast %cst_18 : f32 to vector<16x128xf32>
    %39 = vector.broadcast %cst_19 : f32 to vector<16x128xf32>
    %40 = arith.select %37, %38, %39 : vector<16x128xi1>, vector<16x128xf32>
    %41 = math.absf %35 : vector<16x128xf32>
    %cst_20 = arith.constant 0.327591091 : f32
    %42 = vector.broadcast %cst_20 : f32 to vector<16x128xf32>
    %43 = arith.mulf %42, %41 : vector<16x128xf32>
    %cst_21 = arith.constant 1.000000e+00 : f32
    %44 = vector.broadcast %cst_21 : f32 to vector<16x128xf32>
    %45 = arith.addf %44, %43 : vector<16x128xf32>
    %46 = tpu.reciprocal %45 {approx = true} : vector<16x128xf32> -> vector<16x128xf32>
    %cst_22 = arith.constant 1.06140542 : f32
    %47 = vector.broadcast %cst_22 : f32 to vector<16x128xf32>
    %48 = arith.mulf %47, %46 : vector<16x128xf32>
    %cst_23 = arith.constant -1.45315206 : f32
    %49 = vector.broadcast %cst_23 : f32 to vector<16x128xf32>
    %50 = arith.addf %48, %49 : vector<16x128xf32>
    %51 = arith.mulf %50, %46 : vector<16x128xf32>
    %cst_24 = arith.constant 1.42141378 : f32
    %52 = vector.broadcast %cst_24 : f32 to vector<16x128xf32>
    %53 = arith.addf %51, %52 : vector<16x128xf32>
    %54 = arith.mulf %53, %46 : vector<16x128xf32>
    %cst_25 = arith.constant -0.284496725 : f32
    %55 = vector.broadcast %cst_25 : f32 to vector<16x128xf32>
    %56 = arith.addf %54, %55 : vector<16x128xf32>
    %57 = arith.mulf %56, %46 : vector<16x128xf32>
    %cst_26 = arith.constant 0.254829586 : f32
    %58 = vector.broadcast %cst_26 : f32 to vector<16x128xf32>
    %59 = arith.addf %57, %58 : vector<16x128xf32>
    %60 = arith.mulf %59, %46 : vector<16x128xf32>
    %cst_27 = arith.constant 0.000000e+00 : f32
    %61 = vector.broadcast %cst_27 : f32 to vector<16x128xf32>
    %62 = arith.subf %61, %41 : vector<16x128xf32>
    %63 = arith.mulf %62, %41 : vector<16x128xf32>
    %64 = math.exp %63 : vector<16x128xf32>
    %65 = arith.mulf %60, %64 : vector<16x128xf32>
    %cst_28 = arith.constant 1.000000e+00 : f32
    %66 = vector.broadcast %cst_28 : f32 to vector<16x128xf32>
    %67 = arith.subf %66, %65 : vector<16x128xf32>
    %68 = arith.mulf %40, %67 : vector<16x128xf32>
    %cst_29 = arith.constant 1.000000e+00 : f32
    %69 = vector.broadcast %cst_29 : f32 to vector<16x128xf32>
    %70 = arith.addf %69, %68 : vector<16x128xf32>
    %71 = arith.mulf %33, %70 : vector<16x128xf32>
    %c0_30 = arith.constant 0 : index
    %c0_31 = arith.constant 0 : index
    %72 = vector.load %arg6[%c0_30, %c0_31] : memref<16x128xf32, #tpu.memory_space<vmem>>, vector<16x128xf32>
    tpu.vector_store %arg6[%c0_30, %c0_31], %71 {strides = array<i32>} : memref<16x128xf32, #tpu.memory_space<vmem>>, vector<16x128xf32>,
    return
  }
  func.func @transform_0(%arg0: i32) -> (i32, i32) {
    %c0_i32 = arith.constant 0 : i32
    %c0_i32_0 = arith.constant 0 : i32
    return %arg0, %c0_i32 : i32, i32
  }
  func.func @transform_1(%arg0: i32) -> (i32, i32) {
    %c0_i32 = arith.constant 0 : i32
    %c0_i32_0 = arith.constant 0 : i32
    %c0_i32_1 = arith.constant 0 : i32
    return %c0_i32, %c0_i32_0 : i32, i32
  }
  func.func @transform_2(%arg0: i32) -> (i32, i32) {
    %c0_i32 = arith.constant 0 : i32
    %c0_i32_0 = arith.constant 0 : i32
    %c0_i32_1 = arith.constant 0 : i32
    return %c0_i32, %c0_i32_0 : i32, i32
  }
  func.func @transform_3(%arg0: i32) -> (i32, i32) {
    %c0_i32 = arith.constant 0 : i32
    %c0_i32_0 = arith.constant 0 : i32
    %c0_i32_1 = arith.constant 0 : i32
    return %c0_i32, %c0_i32_0 : i32, i32
  }
  func.func @transform_4(%arg0: i32) -> (i32, i32) {
    %c0_i32 = arith.constant 0 : i32
    %c0_i32_0 = arith.constant 0 : i32
    %c0_i32_1 = arith.constant 0 : i32
    return %c0_i32, %c0_i32_0 : i32, i32
  }
  func.func @transform_5(%arg0: i32) -> (i32, i32) {
    %c0_i32 = arith.constant 0 : i32
    %c0_i32_0 = arith.constant 0 : i32
    return %arg0, %c0_i32 : i32, i32
  }
}

</mosaic_0001>

<llo_original>
// kernel: convblock3_forward.3
$region0: #{convblock3_forward.3}
  #allocation0 [shape = 'u32[]', space=smem, size = 0x4, offset = 0x4, fixed_abs, tag = 'smem constant byte address 0x4 - core index']
  #allocation1 [shape = 'u32[144,128]{1,0:T(1,128)}', space=vmem, size = 0x12000, scoped, tag = 'internal scratch']
  %s0 = inlined_call_operand.vmem [shape: bf16[128,27], index: 0, kind: input, shape index: {}]
  %s1 = inlined_call_operand.vmem [shape: bf16[27,128], index: 1, kind: input, shape index: {}]
  %s2 = inlined_call_operand.vmem [shape: f32[1,128], index: 2, kind: input, shape index: {}]
  %s3 = inlined_call_operand.vmem [shape: f32[1,128], index: 3, kind: input, shape index: {}]
  %s4 = inlined_call_operand.vmem [shape: f32[1,128], index: 4, kind: input, shape index: {}]
  %s5 = inlined_call_operand.vmem [shape: f32[128,128], index: 5, kind: output, shape index: {}]
  %s6 = sld [smem:[#allocation0]]
  $region53: #{convblock3_forward.3} parent=0
    _
  %s8 = ssub.s32 1, %s6
  %s9 = scalar_select 0, %s8, %s6
  loop: start=0, step=1, limit=4
  $region2: #{convblock3_forward.3} parent=0 // loop_pre_header
    _
  $region3: #{convblock3_forward.3} parent=0 // loop_header
    %s11 = sphi 0, %s15
    %p12 = scmp.ge.s32.totalorder %s11, 4
    %s21 = sphi 0, %s23
    %s24 = sphi 0, %s21
    %s25 = sphi 0, %s24
    %s41 = sphi 0, %s25
    %s45 = sphi 0, %s45
    %s47 = sphi 0, %s45
    %s48 = sphi 0, %s47
    %s62 = sphi 0, %s48
    %s66 = sphi 0, %s66
    %s68 = sphi 0, %s66
    %s69 = sphi 0, %s68
    %s83 = sphi 0, %s69
    %s87 = sphi 0, %s87
    %s89 = sphi 0, %s87
    %s90 = sphi 0, %s89
    %s104 = sphi 0, %s90
    %s108 = sphi 0, %s108
    %s110 = sphi 0, %s108
    %s111 = sphi 0, %s110
    %s125 = sphi 0, %s111
    %s131 = sphi 0, %s133
    %s134 = sphi 0, %s131
    %s135 = sphi 0, %s134
    %s151 = sphi 0, %s135
  $region4: #{convblock3_forward.3} parent=0 // loop_header_branch
    %14 = sbr.rel (%p12) target = $region8
  $region5: #{convblock3_forward.3} parent=0 // loop_body
    %s16 = ssub.s32 %s11, 1
    %s17 = ssub.s32 %s11, 2
    %s18 = sadd.s32 %s11, 1
    %s19 = ssub.s32 %s11, %s18
    %p20 = scmp.eq.s32.totalorder %s19, 0
    %s22 = sadd.s32 %s21, 1
    %s23 = scalar_select %p20, %s21, %s22
    %p26 = pneg %p20
    %p27 = scmp.eq.s32.totalorder %s11, 1
    %p28 = por %p26, %p27
    %p29 = scmp.ne.s32.totalorder %s21, %s24
    %p30 = scmp.eq.s32.totalorder %s11, 0
    %p31 = por %p29, %p30
    %p32 = scmp.ne.s32.totalorder %s21, %s24
    %p33 = scmp.eq.s32.totalorder %s16, 1
    %p34 = por %p32, %p33
    %p35 = scmp.ne.s32.totalorder %s24, %s25
    %p36 = scmp.eq.s32.totalorder %s16, 0
    %p37 = por %p35, %p36
    %p38 = scmp.ne.s32.totalorder %s24, %s25
    %p39 = scmp.eq.s32.totalorder %s17, 1
    %p40 = por %p38, %p39
    %p42 = scmp.ne.s32.totalorder %s25, %s41
    %p43 = scmp.eq.s32.totalorder %s17, 0
    %p44 = por %p42, %p43
    %s46 = sadd.s32 %s45, 1
    %p49 = scmp.eq.s32.totalorder %s11, 1
    %p50 = scmp.ne.s32.totalorder %s45, %s47
    %p51 = scmp.eq.s32.totalorder %s11, 0
    %p52 = por %p50, %p51
    %p53 = scmp.ne.s32.totalorder %s45, %s47
    %p54 = scmp.eq.s32.totalorder %s16, 1
    %p55 = por %p53, %p54
    %p56 = scmp.ne.s32.totalorder %s47, %s48
    %p57 = scmp.eq.s32.totalorder %s16, 0
    %p58 = por %p56, %p57
    %p59 = scmp.ne.s32.totalorder %s47, %s48
    %p60 = scmp.eq.s32.totalorder %s17, 1
    %p61 = por %p59, %p60
    %p63 = scmp.ne.s32.totalorder %s48, %s62
    %p64 = scmp.eq.s32.totalorder %s17, 0
    %p65 = por %p63, %p64
    %s67 = sadd.s32 %s66, 1
    %p70 = scmp.eq.s32.totalorder %s11, 1
    %p71 = scmp.ne.s32.totalorder %s66, %s68
    %p72 = scmp.eq.s32.totalorder %s11, 0
    %p73 = por %p71, %p72
    %p74 = scmp.ne.s32.totalorder %s66, %s68
    %p75 = scmp.eq.s32.totalorder %s16, 1
    %p76 = por %p74, %p75
    %p77 = scmp.ne.s32.totalorder %s68, %s69
    %p78 = scmp.eq.s32.totalorder %s16, 0
    %p79 = por %p77, %p78
    %p80 = scmp.ne.s32.totalorder %s68, %s69
    %p81 = scmp.eq.s32.totalorder %s17, 1
    %p82 = por %p80, %p81
    %p84 = scmp.ne.s32.totalorder %s69, %s83
    %p85 = scmp.eq.s32.totalorder %s17, 0
    %p86 = por %p84, %p85
    %s88 = sadd.s32 %s87, 1
    %p91 = scmp.eq.s32.totalorder %s11, 1
    %p92 = scmp.ne.s32.totalorder %s87, %s89
    %p93 = scmp.eq.s32.totalorder %s11, 0
    %p94 = por %p92, %p93
    %p95 = scmp.ne.s32.totalorder %s87, %s89
    %p96 = scmp.eq.s32.totalorder %s16, 1
    %p97 = por %p95, %p96
    %p98 = scmp.ne.s32.totalorder %s89, %s90
    %p99 = scmp.eq.s32.totalorder %s16, 0
    %p100 = por %p98, %p99
    %p101 = scmp.ne.s32.totalorder %s89, %s90
    %p102 = scmp.eq.s32.totalorder %s17, 1
    %p103 = por %p101, %p102
    %p105 = scmp.ne.s32.totalorder %s90, %s104
    %p106 = scmp.eq.s32.totalorder %s17, 0
    %p107 = por %p105, %p106
    %s109 = sadd.s32 %s108, 1
    %p112 = scmp.eq.s32.totalorder %s11, 1
    %p113 = scmp.ne.s32.totalorder %s108, %s110
    %p114 = scmp.eq.s32.totalorder %s11, 0
    %p115 = por %p113, %p114
    %p116 = scmp.ne.s32.totalorder %s108, %s110
    %p117 = scmp.eq.s32.totalorder %s16, 1
    %p118 = por %p116, %p117
    %p119 = scmp.ne.s32.totalorder %s110, %s111
    %p120 = scmp.eq.s32.totalorder %s16, 0
    %p121 = por %p119, %p120
    %p122 = scmp.ne.s32.totalorder %s110, %s111
    %p123 = scmp.eq.s32.totalorder %s17, 1
    %p124 = por %p122, %p123
    %p126 = scmp.ne.s32.totalorder %s111, %s125
    %p127 = scmp.eq.s32.totalorder %s17, 0
    %p128 = por %p126, %p127
    %s129 = ssub.s32 %s11, %s18
    %p130 = scmp.eq.s32.totalorder %s129, 0
    %s132 = sadd.s32 %s131, 1
    %s133 = scalar_select %p130, %s131, %s132
    %p136 = pneg %p130
    %p137 = scmp.eq.s32.totalorder %s11, 1
    %p138 = por %p136, %p137
    %p139 = scmp.ne.s32.totalorder %s131, %s134
    %p140 = scmp.eq.s32.totalorder %s11, 0
    %p141 = por %p139, %p140
    %p142 = scmp.ne.s32.totalorder %s131, %s134
    %p143 = scmp.eq.s32.totalorder %s16, 1
    %p144 = por %p142, %p143
    %p145 = scmp.ne.s32.totalorder %s134, %s135
    %p146 = scmp.eq.s32.totalorder %s16, 0
    %p147 = por %p145, %p146
    %p148 = scmp.ne.s32.totalorder %s134, %s135
    %p149 = scmp.eq.s32.totalorder %s17, 1
    %p150 = por %p148, %p149
    %p152 = scmp.ne.s32.totalorder %s135, %s151
    %p153 = scmp.eq.s32.totalorder %s17, 0
    %p154 = por %p152, %p153
    %p155 = scmp.le.s32.totalorder 1, %s11
    %p156 = scmp.lt.s32.totalorder %s11, 3
    %p157 = pnand %p155, %p156
    %p158 = pneg %p157
    // Predicated region
    $region9: #{convblock3_forward.3} parent=5 // pred_check
      _
    $region10: #{convblock3_forward.3} parent=5 // pred_check_branch
      %160 = sbr.rel (%p157) target = $region12
    $region11: #{convblock3_forward.3} parent=5 // pred_region
      %s161 = ssub.s32 %s11, 1
      // Predicated region
      $region13: #{convblock3_forward.3} parent=11 // pred_check
        %p162 = pneg %p58
      $region14: #{convblock3_forward.3} parent=11 // pred_check_branch
        %164 = sbr.rel (%p162) target = $region16
      $region15: #{convblock3_forward.3} parent=11 // pred_region
        _
      $region16: #{convblock3_forward.3} parent=11 // pred_fallthru
        _
      // Predicated region
      $region17: #{convblock3_forward.3} parent=11 // pred_check
        %p165 = pneg %p79
      $region18: #{convblock3_forward.3} parent=11 // pred_check_branch
        %167 = sbr.rel (%p165) target = $region20
      $region19: #{convblock3_forward.3} parent=11 // pred_region
        _
      $region20: #{convblock3_forward.3} parent=11 // pred_fallthru
        _
      // Predicated region
      $region21: #{convblock3_forward.3} parent=11 // pred_check
        %p168 = pneg %p100
      $region22: #{convblock3_forward.3} parent=11 // pred_check_branch
        %170 = sbr.rel (%p168) target = $region24
      $region23: #{convblock3_forward.3} parent=11 // pred_region
        _
      $region24: #{convblock3_forward.3} parent=11 // pred_fallthru
        _
      // Predicated region
      $region25: #{convblock3_forward.3} parent=11 // pred_check
        %p171 = pneg %p121
      $region26: #{convblock3_forward.3} parent=11 // pred_check_branch
        %173 = sbr.rel (%p171) target = $region28
      $region27: #{convblock3_forward.3} parent=11 // pred_region
        _
      $region28: #{convblock3_forward.3} parent=11 // pred_fallthru
        _
    $region12: #{convblock3_forward.3} parent=5 // pred_fallthru
      _
    %p174 = scmp.lt.s32.totalorder %s11, 2
    // Predicated region
    $region29: #{convblock3_forward.3} parent=5 // pred_check
      %p175 = pneg %p174
    $region30: #{convblock3_forward.3} parent=5 // pred_check_branch
      %177 = sbr.rel (%p175) target = $region32
    $region31: #{convblock3_forward.3} parent=5 // pred_region
      // Predicated region
      $region33: #{convblock3_forward.3} parent=31 // pred_check
        %p178 = pneg %p31
      $region34: #{convblock3_forward.3} parent=31 // pred_check_branch
        %180 = sbr.rel (%p178) target = $region36
      $region35: #{convblock3_forward.3} parent=31 // pred_region
        %s181 = smul.u32 8, %s11
        %p182 = scmp.lt.s32.totalorder %s181, 15
        %s183 = scalar_select %p182, %s181, 15
        %s184 = smul.addr %s183, 4
        %s185 = scalar_lea.vmem %s0, %s184
        %s186 = smul.u32 8, %s11
      $region36: #{convblock3_forward.3} parent=31 // pred_fallthru
        _
    $region32: #{convblock3_forward.3} parent=5 // pred_fallthru
      _
    %p187 = scmp.le.s32.totalorder 1, %s11
    %p188 = scmp.lt.s32.totalorder %s11, 3
    %p189 = pnand %p187, %p188
    %p190 = pneg %p189
    // Predicated region
    $region37: #{convblock3_forward.3} parent=5 // pred_check
      _
    $region38: #{convblock3_forward.3} parent=5 // pred_check_branch
      %192 = sbr.rel (%p189) target = $region40
    $region39: #{convblock3_forward.3} parent=5 // pred_region
      %s193 = ssub.s32 %s11, 1
      %s194 = smul.u32 8, %s16
      %p195 = scmp.lt.s32.totalorder %s194, 15
      %s196 = scalar_select %p195, %s194, 15
      %s197 = smul.addr %s196, 4
      %s198 = scalar_lea.vmem %s0, %s197
      %p199 = pneg %p37
      %p200 = pneg %p34
      %p201 = pneg %p58
      %p202 = pneg %p55
      %p203 = pneg %p79
      %p204 = pneg %p76
      %p205 = pneg %p100
      %p206 = pneg %p97
      %p207 = pneg %p121
      %p208 = pneg %p118
      %p209 = pneg %p147
      %p210 = pneg %p144
      %s211 = smul.u32 8, %s16
      %p212 = scmp.lt.s32.totalorder %s211, 15
      %s213 = scalar_select %p212, %s211, 15
      %s214 = smul.addr %s213, 8
      %s215 = scalar_lea.vmem %s5, %s214
      %s216 = smul.u32 8, %s16
      %p217 = scmp.lt.s32.totalorder %s216, 15
      %s218 = scalar_select %p217, %s216, 15
      %s219 = smul.addr %s218, 4
      %s220 = scalar_lea.vmem %s0, %s219
      %s221 = smul.u32 8, %s16
      %s222 = smul.u32 8, %s16
      %p223 = scmp.lt.s32.totalorder %s222, 15
      %s224 = scalar_select %p223, %s222, 15
      %s225 = smul.addr %s224, 8
      %s226 = scalar_lea.vmem %s5, %s225
      %s227 = smul.u32 8, %s16
      %v229 = vld [vmem:[%s220] sm:$0xf]
      %v230 = vld [vmem:[%s220 + $0x4] sm:$0xf]
      %v231 = vld [vmem:[%s220 + $0x8] sm:$0xf]
      %v232 = vld [vmem:[%s220 + $0xc] sm:$0xf]
      %v233 = vld [vmem:[%s220 + $0x10] sm:$0xf]
      %v234 = vld [vmem:[%s220 + $0x14] sm:$0xf]
      %v235 = vld [vmem:[%s220 + $0x18] sm:$0xf]
      %v236 = vld [vmem:[%s220 + $0x1c] sm:$0xf]
      %v237 = vld [vmem:[%s1] sm:$0xf]
      %v238 = vld [vmem:[%s1 + $0x4] sm:$0xf]
      %v239 = vld [vmem:[%s1 + $0x8] sm:$0xf]
      %v240 = vld [vmem:[%s1 + $0xc] sm:$0x3]
      %v241 = vld [vmem:[%s2] sm:$0x1]
      %v243 = vlaneseq
      %v244 = vshrl.u32 %v243, 7
      %v245 = vsub.s32 0, %v244
      %v246 = vrot.slane %v241, %v245
      %v256 = vunpack.c.l.b16 %v229
      %v257 = vunpack.c.l.b16 %v230
      %v258 = vunpack.c.l.b16 %v231
      %v259 = vunpack.c.l.b16 %v232
      %v260 = vunpack.c.l.b16 %v233
      %v261 = vunpack.c.l.b16 %v234
      %v262 = vunpack.c.l.b16 %v235
      %v263 = vunpack.c.l.b16 %v236
      %v264 = vpack.c.b16 %v257, %v256
      %v265 = vpack.c.b16 %v259, %v258
      %v266 = vpack.c.b16 %v261, %v260
      %v267 = vpack.c.b16 %v263, %v262
      %v272 = vunpack.c.l.b16 %v237
      %v273 = vunpack.c.l.b16 %v238
      %v274 = vunpack.c.l.b16 %v239
      %v275 = vunpack.c.l.b16 %v240
      %v276 = vpack.c.b16 %v273, %v272
      %v277 = vpack.c.b16 %v275, %v274
      %vm279 = vcmask 220160
      %v281 = vsel %vm279, %v264, 0
      %v284 = vsel %vm279, %v265, 0
      %v287 = vsel %vm279, %v266, 0
      %v290 = vsel %vm279, %v267, 0
      %vm292 = vcmask 1044480
      %vm293 = vcmask 1045504
      %v294 = vsel %vm292, 4294967295, 65535
      %v295 = vsel %vm293, %v294, 0
      %v297 = vand.u32 %v277, %v295
      %299 = vmatprep.subr.bf16.mxu0 0
      %300 = vmatpush1.bf16.msra.mxu0 %v276
      %301 = vmatprep.subr.bf16.mxu0 0
      %302 = vmatpush1.bf16.msra.mxu0 %v297
      %303 = vmatprep.subr.bf16.mxu0 0
      %304 = vmatpush1.bf16.msra.mxu0 0
      %305 = vmatprep.subr.bf16.mxu0 0
      %306 = vmatpush1.bf16.msra.mxu0 0
      %307 = vmatprep.subr.bf16.mxu0 0
      %308 = vmatpush1.bf16.msra.mxu0 0
      %309 = vmatprep.subr.bf16.mxu0 0
      %310 = vmatpush1.bf16.msra.mxu0 0
      %311 = vmatprep.subr.bf16.mxu0 0
      %312 = vmatpush1.bf16.msra.mxu0 0
      %313 = vmatprep.subr.bf16.mxu0 0
      %314 = vmatpush1.bf16.msra.mxu0 0
      %315 = vmatprep.subr.bf16.mxu0 0
      %316 = vmatpush1.bf16.msra.mxu0 0
      %317 = vmatprep.subr.bf16.mxu0 0
      %318 = vmatpush1.bf16.msra.mxu0 0
      %319 = vmatprep.subr.bf16.mxu0 0
      %320 = vmatpush1.bf16.msra.mxu0 0
      %321 = vmatprep.subr.bf16.mxu0 0
      %322 = vmatpush1.bf16.msra.mxu0 0
      %323 = vmatprep.subr.bf16.mxu0 0
      %324 = vmatpush1.bf16.msra.mxu0 0
      %325 = vmatprep.subr.bf16.mxu0 0
      %326 = vmatpush1.bf16.msra.mxu0 0
      %327 = vmatprep.subr.bf16.mxu0 0
      %328 = vmatpush1.bf16.msra.mxu0 0
      %329 = vmatprep.subr.bf16.mxu0 0
      %330 = vmatpush1.bf16.msra.mxu0 0
      %331 = vmatprep.mubr.bf16.mxu0 0
      %332 = vmatmul.mubr.bf16.gmra.mrb[0].mxu0 %v281
      %v333 = vpop.f32.mrb[0].mxu0
      %v334 = vadd.f32 %v246, %v333
      %v335 = vpop.f32.mrb[0].mxu0
      %v336 = vpop.f32.mrb[0].mxu0
      %v337 = vadd.f32 %v246, %v336
      %v338 = vpop.f32.mrb[0].mxu0
      %339 = vmatprep.mubr.bf16.mxu0 0
      %340 = vmatmul.mubr.bf16.gmra.mrb[0].mxu0 %v284
      %v341 = vpop.f32.mrb[0].mxu0
      %v342 = vadd.f32 %v246, %v341
      %v343 = vpop.f32.mrb[0].mxu0
      %v344 = vpop.f32.mrb[0].mxu0
      %v345 = vadd.f32 %v246, %v344
      %v346 = vpop.f32.mrb[0].mxu0
      %347 = vmatprep.mubr.bf16.mxu0 0
      %348 = vmatmul.mubr.bf16.gmra.mrb[0].mxu0 %v287
      %v349 = vpop.f32.mrb[0].mxu0
      %v350 = vadd.f32 %v246, %v349
      %v351 = vpop.f32.mrb[0].mxu0
      %v352 = vpop.f32.mrb[0].mxu0
      %v353 = vadd.f32 %v246, %v352
      %v354 = vpop.f32.mrb[0].mxu0
      %355 = vmatprep.mubr.bf16.mxu0 0
      %356 = vmatmul.mubr.bf16.gmra.mrb[0].mxu0 %v290
      %v357 = vpop.f32.mrb[0].mxu0
      %v358 = vadd.f32 %v246, %v357
      %v359 = vpop.f32.mrb[0].mxu0
      %v360 = vpop.f32.mrb[0].mxu0
      %v361 = vadd.f32 %v246, %v360
      %v362 = vpop.f32.mrb[0].mxu0
      %363 = vdwg.mxu0
      %364 = vadd.xlane.f32.xlu0 %v334
      %v365 = vpop.xlane.xlu0 %364
      %366 = vadd.xlane.f32.xlu0 %v337
      %v367 = vpop.xlane.xlu0 %366
      %368 = vadd.xlane.f32.xlu0 %v342
      %v369 = vpop.xlane.xlu0 %368
      %370 = vadd.xlane.f32.xlu0 %v345
      %v371 = vpop.xlane.xlu0 %370
      %372 = vadd.xlane.f32.xlu0 %v350
      %v373 = vpop.xlane.xlu0 %372
      %374 = vadd.xlane.f32.xlu0 %v353
      %v375 = vpop.xlane.xlu0 %374
      %376 = vadd.xlane.f32.xlu0 %v358
      %v377 = vpop.xlane.xlu0 %376
      %378 = vadd.xlane.f32.xlu0 %v361
      %v379 = vpop.xlane.xlu0 %378
      %v380 = vmul.f32 %v334, %v334
      %v381 = vmul.f32 %v337, %v337
      %v382 = vmul.f32 %v342, %v342
      %v383 = vmul.f32 %v345, %v345
      %v384 = vmul.f32 %v350, %v350
      %v385 = vmul.f32 %v353, %v353
      %v386 = vmul.f32 %v358, %v358
      %v387 = vmul.f32 %v361, %v361
      %388 = vadd.xlane.f32.xlu0 %v380
      %v389 = vpop.xlane.xlu0 %388
      %390 = vadd.xlane.f32.xlu0 %v381
      %v391 = vpop.xlane.xlu0 %390
      %392 = vadd.xlane.f32.xlu0 %v382
      %v393 = vpop.xlane.xlu0 %392
      %394 = vadd.xlane.f32.xlu0 %v383
      %v395 = vpop.xlane.xlu0 %394
      %396 = vadd.xlane.f32.xlu0 %v384
      %v397 = vpop.xlane.xlu0 %396
      %398 = vadd.xlane.f32.xlu0 %v385
      %v399 = vpop.xlane.xlu0 %398
      %400 = vadd.xlane.f32.xlu0 %v386
      %v401 = vpop.xlane.xlu0 %400
      %402 = vadd.xlane.f32.xlu0 %v387
      %v403 = vpop.xlane.xlu0 %402
      %v404 = vmul.f32 %v365, 0.125
      %v405 = vmul.f32 %v367, 0.125
      %v406 = vmul.f32 %v369, 0.125
      %v407 = vmul.f32 %v371, 0.125
      %v408 = vmul.f32 %v373, 0.125
      %v409 = vmul.f32 %v375, 0.125
      %v410 = vmul.f32 %v377, 0.125
      %v411 = vmul.f32 %v379, 0.125
      %v412 = vmul.f32 %v389, 0.125
      %v413 = vmul.f32 %v391, 0.125
      %v414 = vmul.f32 %v393, 0.125
      %v415 = vmul.f32 %v395, 0.125
      %v416 = vmul.f32 %v397, 0.125
      %v417 = vmul.f32 %v399, 0.125
      %v418 = vmul.f32 %v401, 0.125
      %v419 = vmul.f32 %v403, 0.125
      %v420 = vmul.f32 %v404, %v404
      %v421 = vmul.f32 %v405, %v405
      %v422 = vmul.f32 %v406, %v406
      %v423 = vmul.f32 %v407, %v407
      %v424 = vmul.f32 %v408, %v408
      %v425 = vmul.f32 %v409, %v409
      %v426 = vmul.f32 %v410, %v410
      %v427 = vmul.f32 %v411, %v411
      %v428 = vsub.f32 %v412, %v420
      %v429 = vsub.f32 %v413, %v421
      %v430 = vsub.f32 %v414, %v422
      %v431 = vsub.f32 %v415, %v423
      %v432 = vsub.f32 %v416, %v424
      %v433 = vsub.f32 %v417, %v425
      %v434 = vsub.f32 %v418, %v426
      %v435 = vsub.f32 %v419, %v427
      %v436 = vmax.f32 %v428, 0.0
      %v437 = vmax.f32 %v429, 0.0
      %v438 = vmax.f32 %v430, 0.0
      %v439 = vmax.f32 %v431, 0.0
      %v440 = vmax.f32 %v432, 0.0
      %v441 = vmax.f32 %v433, 0.0
      %v442 = vmax.f32 %v434, 0.0
      %v443 = vmax.f32 %v435, 0.0
      %v444 = vsub.f32 %v334, %v404
      %v445 = vsub.f32 %v337, %v405
      %v446 = vsub.f32 %v342, %v406
      %v447 = vsub.f32 %v345, %v407
      %v448 = vsub.f32 %v350, %v408
      %v449 = vsub.f32 %v353, %v409
      %v450 = vsub.f32 %v358, %v410
      %v451 = vsub.f32 %v361, %v411
      %v452 = vadd.f32 %v436, 1e-06
      %v453 = vadd.f32 %v437, 1e-06
      %v454 = vadd.f32 %v438, 1e-06
      %v455 = vadd.f32 %v439, 1e-06
      %v456 = vadd.f32 %v440, 1e-06
      %v457 = vadd.f32 %v441, 1e-06
      %v458 = vadd.f32 %v442, 1e-06
      %v459 = vadd.f32 %v443, 1e-06
      %v460 = vrsqrt.pop %v452
      %v461 = vrsqrt.pop %v453
      %v462 = vrsqrt.pop %v454
      %v463 = vrsqrt.pop %v455
      %v464 = vrsqrt.pop %v456
      %v465 = vrsqrt.pop %v457
      %v466 = vrsqrt.pop %v458
      %v467 = vrsqrt.pop %v459
      %v468 = vmul.f32 %v444, %v460
      %v469 = vmul.f32 %v445, %v461
      %v470 = vmul.f32 %v446, %v462
      %v471 = vmul.f32 %v447, %v463
      %v472 = vmul.f32 %v448, %v464
      %v473 = vmul.f32 %v449, %v465
      %v474 = vmul.f32 %v450, %v466
      %v475 = vmul.f32 %v451, %v467
      %v476 = vld [vmem:[%s3] sm:$0x1]
      %v478 = vlaneseq
      %v479 = vshrl.u32 %v478, 7
      %v480 = vsub.s32 0, %v479
      %v481 = vrot.slane %v476, %v480
      %v483 = vmul.f32 %v468, %v481
      %v484 = vmul.f32 %v469, %v481
      %v485 = vmul.f32 %v470, %v481
      %v486 = vmul.f32 %v471, %v481
      %v487 = vmul.f32 %v472, %v481
      %v488 = vmul.f32 %v473, %v481
      %v489 = vmul.f32 %v474, %v481
      %v490 = vmul.f32 %v475, %v481
      %v491 = vld [vmem:[%s4] sm:$0x1]
      %v493 = vlaneseq
      %v494 = vshrl.u32 %v493, 7
      %v495 = vsub.s32 0, %v494
      %v496 = vrot.slane %v491, %v495
      %v498 = vadd.f32 %v483, %v496
      %v499 = vadd.f32 %v484, %v496
      %v500 = vadd.f32 %v485, %v496
      %v501 = vadd.f32 %v486, %v496
      %v502 = vadd.f32 %v487, %v496
      %v503 = vadd.f32 %v488, %v496
      %v504 = vadd.f32 %v489, %v496
      %v505 = vadd.f32 %v490, %v496
      %v506 = vmul.f32 %v498, 0.5
      %v507 = vmul.f32 %v499, 0.5
      %v508 = vmul.f32 %v500, 0.5
      %v509 = vmul.f32 %v501, 0.5
      %v510 = vmul.f32 %v502, 0.5
      %v511 = vmul.f32 %v503, 0.5
      %v512 = vmul.f32 %v504, 0.5
      %v513 = vmul.f32 %v505, 0.5
      %v514 = vmul.f32 %v498, 0.70710677
      %v515 = vmul.f32 %v499, 0.70710677
      %v516 = vmul.f32 %v500, 0.70710677
      %v517 = vmul.f32 %v501, 0.70710677
      %v518 = vmul.f32 %v502, 0.70710677
      %v519 = vmul.f32 %v503, 0.70710677
      %v520 = vmul.f32 %v504, 0.70710677
      %v521 = vmul.f32 %v505, 0.70710677
      %vm522 = vcmp.ge.f32.partialorder %v514, 0.0
      %vm523 = vcmp.ge.f32.partialorder %v515, 0.0
      %vm524 = vcmp.ge.f32.partialorder %v516, 0.0
      %vm525 = vcmp.ge.f32.partialorder %v517, 0.0
      %vm526 = vcmp.ge.f32.partialorder %v518, 0.0
      %vm527 = vcmp.ge.f32.partialorder %v519, 0.0
      %vm528 = vcmp.ge.f32.partialorder %v520, 0.0
      %vm529 = vcmp.ge.f32.partialorder %v521, 0.0
      %v530 = vsel %vm522, 1.0, -1.0
      %v531 = vsel %vm523, 1.0, -1.0
      %v532 = vsel %vm524, 1.0, -1.0
      %v533 = vsel %vm525, 1.0, -1.0
      %v534 = vsel %vm526, 1.0, -1.0
      %v535 = vsel %vm527, 1.0, -1.0
      %v536 = vsel %vm528, 1.0, -1.0
      %v537 = vsel %vm529, 1.0, -1.0
      %v538 = vand.u32 2147483647, %v514
      %v539 = vand.u32 2147483647, %v515
      %v540 = vand.u32 2147483647, %v516
      %v541 = vand.u32 2147483647, %v517
      %v542 = vand.u32 2147483647, %v518
      %v543 = vand.u32 2147483647, %v519
      %v544 = vand.u32 2147483647, %v520
      %v545 = vand.u32 2147483647, %v521
      %v546 = vmul.f32 %v538, 0.3275911
      %v547 = vmul.f32 %v539, 0.3275911
      %v548 = vmul.f32 %v540, 0.3275911
      %v549 = vmul.f32 %v541, 0.3275911
      %v550 = vmul.f32 %v542, 0.3275911
      %v551 = vmul.f32 %v543, 0.3275911
      %v552 = vmul.f32 %v544, 0.3275911
      %v553 = vmul.f32 %v545, 0.3275911
      %v554 = vadd.f32 %v546, 1.0
      %v555 = vadd.f32 %v547, 1.0
      %v556 = vadd.f32 %v548, 1.0
      %v557 = vadd.f32 %v549, 1.0
      %v558 = vadd.f32 %v550, 1.0
      %v559 = vadd.f32 %v551, 1.0
      %v560 = vadd.f32 %v552, 1.0
      %v561 = vadd.f32 %v553, 1.0
      %v562 = vrcp.pop %v554
      %v563 = vrcp.pop %v555
      %v564 = vrcp.pop %v556
      %v565 = vrcp.pop %v557
      %v566 = vrcp.pop %v558
      %v567 = vrcp.pop %v559
      %v568 = vrcp.pop %v560
      %v569 = vrcp.pop %v561
      %v570 = vmul.f32 %v562, 1.0614054
      %v571 = vmul.f32 %v563, 1.0614054
      %v572 = vmul.f32 %v564, 1.0614054
      %v573 = vmul.f32 %v565, 1.0614054
      %v574 = vmul.f32 %v566, 1.0614054
      %v575 = vmul.f32 %v567, 1.0614054
      %v576 = vmul.f32 %v568, 1.0614054
      %v577 = vmul.f32 %v569, 1.0614054
      %v578 = vadd.f32 %v570, -1.4531521
      %v579 = vadd.f32 %v571, -1.4531521
      %v580 = vadd.f32 %v572, -1.4531521
      %v581 = vadd.f32 %v573, -1.4531521
      %v582 = vadd.f32 %v574, -1.4531521
      %v583 = vadd.f32 %v575, -1.4531521
      %v584 = vadd.f32 %v576, -1.4531521
      %v585 = vadd.f32 %v577, -1.4531521
      %v586 = vmul.f32 %v578, %v562
      %v587 = vmul.f32 %v579, %v563
      %v588 = vmul.f32 %v580, %v564
      %v589 = vmul.f32 %v581, %v565
      %v590 = vmul.f32 %v582, %v566
      %v591 = vmul.f32 %v583, %v567
      %v592 = vmul.f32 %v584, %v568
      %v593 = vmul.f32 %v585, %v569
      %v594 = vadd.f32 %v586, 1.4214138
      %v595 = vadd.f32 %v587, 1.4214138
      %v596 = vadd.f32 %v588, 1.4214138
      %v597 = vadd.f32 %v589, 1.4214138
      %v598 = vadd.f32 %v590, 1.4214138
      %v599 = vadd.f32 %v591, 1.4214138
      %v600 = vadd.f32 %v592, 1.4214138
      %v601 = vadd.f32 %v593, 1.4214138
      %v602 = vmul.f32 %v594, %v562
      %v603 = vmul.f32 %v595, %v563
      %v604 = vmul.f32 %v596, %v564
      %v605 = vmul.f32 %v597, %v565
      %v606 = vmul.f32 %v598, %v566
      %v607 = vmul.f32 %v599, %v567
      %v608 = vmul.f32 %v600, %v568
      %v609 = vmul.f32 %v601, %v569
      %v610 = vadd.f32 %v602, -0.28449672
      %v611 = vadd.f32 %v603, -0.28449672
      %v612 = vadd.f32 %v604, -0.28449672
      %v613 = vadd.f32 %v605, -0.28449672
      %v614 = vadd.f32 %v606, -0.28449672
      %v615 = vadd.f32 %v607, -0.28449672
      %v616 = vadd.f32 %v608, -0.28449672
      %v617 = vadd.f32 %v609, -0.28449672
      %v618 = vmul.f32 %v610, %v562
      %v619 = vmul.f32 %v611, %v563
      %v620 = vmul.f32 %v612, %v564
      %v621 = vmul.f32 %v613, %v565
      %v622 = vmul.f32 %v614, %v566
      %v623 = vmul.f32 %v615, %v567
      %v624 = vmul.f32 %v616, %v568
      %v625 = vmul.f32 %v617, %v569
      %v626 = vadd.f32 %v618, 0.2548296
      %v627 = vadd.f32 %v619, 0.2548296
      %v628 = vadd.f32 %v620, 0.2548296
      %v629 = vadd.f32 %v621, 0.2548296
      %v630 = vadd.f32 %v622, 0.2548296
      %v631 = vadd.f32 %v623, 0.2548296
      %v632 = vadd.f32 %v624, 0.2548296
      %v633 = vadd.f32 %v625, 0.2548296
      %v634 = vmul.f32 %v626, %v562
      %v635 = vmul.f32 %v627, %v563
      %v636 = vmul.f32 %v628, %v564
      %v637 = vmul.f32 %v629, %v565
      %v638 = vmul.f32 %v630, %v566
      %v639 = vmul.f32 %v631, %v567
      %v640 = vmul.f32 %v632, %v568
      %v641 = vmul.f32 %v633, %v569
      %v642 = vsub.f32 0.0, %v538
      %v643 = vsub.f32 0.0, %v539
      %v644 = vsub.f32 0.0, %v540
      %v645 = vsub.f32 0.0, %v541
      %v646 = vsub.f32 0.0, %v542
      %v647 = vsub.f32 0.0, %v543
      %v648 = vsub.f32 0.0, %v544
      %v649 = vsub.f32 0.0, %v545
      %v650 = vmul.f32 %v642, %v538
      %v651 = vmul.f32 %v643, %v539
      %v652 = vmul.f32 %v644, %v540
      %v653 = vmul.f32 %v645, %v541
      %v654 = vmul.f32 %v646, %v542
      %v655 = vmul.f32 %v647, %v543
      %v656 = vmul.f32 %v648, %v544
      %v657 = vmul.f32 %v649, %v545
      %v658 = vmul.f32 %v650, 1.442695
      %v659 = vpow.pop %v658
      %v660 = vmul.f32 %v651, 1.442695
      %v661 = vpow.pop %v660
      %v662 = vmul.f32 %v652, 1.442695
      %v663 = vpow.pop %v662
      %v664 = vmul.f32 %v653, 1.442695
      %v665 = vpow.pop %v664
      %v666 = vmul.f32 %v654, 1.442695
      %v667 = vpow.pop %v666
      %v668 = vmul.f32 %v655, 1.442695
      %v669 = vpow.pop %v668
      %v670 = vmul.f32 %v656, 1.442695
      %v671 = vpow.pop %v670
      %v672 = vmul.f32 %v657, 1.442695
      %v673 = vpow.pop %v672
      %v674 = vmul.f32 %v634, %v659
      %v675 = vmul.f32 %v635, %v661
      %v676 = vmul.f32 %v636, %v663
      %v677 = vmul.f32 %v637, %v665
      %v678 = vmul.f32 %v638, %v667
      %v679 = vmul.f32 %v639, %v669
      %v680 = vmul.f32 %v640, %v671
      %v681 = vmul.f32 %v641, %v673
      %v682 = vsub.f32 1.0, %v674
      %v683 = vsub.f32 1.0, %v675
      %v684 = vsub.f32 1.0, %v676
      %v685 = vsub.f32 1.0, %v677
      %v686 = vsub.f32 1.0, %v678
      %v687 = vsub.f32 1.0, %v679
      %v688 = vsub.f32 1.0, %v680
      %v689 = vsub.f32 1.0, %v681
      %v690 = vmul.f32 %v530, %v682
      %v691 = vmul.f32 %v531, %v683
      %v692 = vmul.f32 %v532, %v684
      %v693 = vmul.f32 %v533, %v685
      %v694 = vmul.f32 %v534, %v686
      %v695 = vmul.f32 %v535, %v687
      %v696 = vmul.f32 %v536, %v688
      %v697 = vmul.f32 %v537, %v689
      %v698 = vadd.f32 %v690, 1.0
      %v699 = vadd.f32 %v691, 1.0
      %v700 = vadd.f32 %v692, 1.0
      %v701 = vadd.f32 %v693, 1.0
      %v702 = vadd.f32 %v694, 1.0
      %v703 = vadd.f32 %v695, 1.0
      %v704 = vadd.f32 %v696, 1.0
      %v705 = vadd.f32 %v697, 1.0
      %v706 = vmul.f32 %v506, %v698
      %v707 = vmul.f32 %v507, %v699
      %v708 = vmul.f32 %v508, %v700
      %v709 = vmul.f32 %v509, %v701
      %v710 = vmul.f32 %v510, %v702
      %v711 = vmul.f32 %v511, %v703
      %v712 = vmul.f32 %v512, %v704
      %v713 = vmul.f32 %v513, %v705
      %714 = vst [vmem:[%s226] sm:$0xff] %v706
      %715 = vst [vmem:[%s226 + $0x8] sm:$0xff] %v707
      %716 = vst [vmem:[%s226 + $0x10] sm:$0xff] %v708
      %717 = vst [vmem:[%s226 + $0x18] sm:$0xff] %v709
      %718 = vst [vmem:[%s226 + $0x20] sm:$0xff] %v710
      %719 = vst [vmem:[%s226 + $0x28] sm:$0xff] %v711
      %720 = vst [vmem:[%s226 + $0x30] sm:$0xff] %v712
      %721 = vst [vmem:[%s226 + $0x38] sm:$0xff] %v713
      %s722 = smul.u32 8, %s16
      %p723 = scmp.lt.s32.totalorder %s722, 15
      %s724 = scalar_select %p723, %s722, 15
      %s725 = smul.addr %s724, 8
      %s726 = scalar_lea.vmem %s5, %s725
      // Predicated region
      $region41: #{convblock3_forward.3} parent=39 // pred_check
        %p727 = pneg %p144
      $region42: #{convblock3_forward.3} parent=39 // pred_check_branch
        %729 = sbr.rel (%p727) target = $region44
      $region43: #{convblock3_forward.3} parent=39 // pred_region
        %s730 = smul.u32 8, %s16
      $region44: #{convblock3_forward.3} parent=39 // pred_fallthru
        _
    $region40: #{convblock3_forward.3} parent=5 // pred_fallthru
      _
    %p731 = scmp.le.s32.totalorder 2, %s11
    // Predicated region
    $region45: #{convblock3_forward.3} parent=5 // pred_check
      %p732 = pneg %p731
    $region46: #{convblock3_forward.3} parent=5 // pred_check_branch
      %734 = sbr.rel (%p732) target = $region48
    $region47: #{convblock3_forward.3} parent=5 // pred_region
      %s735 = ssub.s32 %s11, 2
      // Predicated region
      $region49: #{convblock3_forward.3} parent=47 // pred_check
        %p736 = pneg %p150
      $region50: #{convblock3_forward.3} parent=47 // pred_check_branch
        %738 = sbr.rel (%p736) target = $region52
      $region51: #{convblock3_forward.3} parent=47 // pred_region
        %s739 = smul.u32 8, %s17
        %p740 = scmp.lt.s32.totalorder %s739, 15
        %s741 = scalar_select %p740, %s739, 15
        %s742 = smul.addr %s741, 8
        %s743 = scalar_lea.vmem %s5, %s742
      $region52: #{convblock3_forward.3} parent=47 // pred_fallthru
        _
    $region48: #{convblock3_forward.3} parent=5 // pred_fallthru
      _
  $region6: #{convblock3_forward.3} parent=0 // loop_footer
    %s15 = sadd.s32 1, %s11
  $region7: #{convblock3_forward.3} parent=0 // loop_footer_branch
    %10 = sbr.rel target = $region3
  $region8: #{convblock3_forward.3} parent=0 // loop_exit
    _

// kernel: convblock3_forward.4
$region0: #{convblock3_forward.4}
  #allocation0 [shape = 'u32[]', space=smem, size = 0x4, offset = 0x4, fixed_abs, tag = 'smem constant byte address 0x4 - core index']
  #allocation1 [shape = 'u32[144,128]{1,0:T(1,128)}', space=vmem, size = 0x12000, scoped, tag = 'internal scratch']
  %s0 = inlined_call_operand.vmem [shape: bf16[32,72], index: 0, kind: input, shape index: {}]
  %s1 = inlined_call_operand.vmem [shape: bf16[72,128], index: 1, kind: input, shape index: {}]
  %s2 = inlined_call_operand.vmem [shape: f32[1,128], index: 2, kind: input, shape index: {}]
  %s3 = inlined_call_operand.vmem [shape: f32[1,128], index: 3, kind: input, shape index: {}]
  %s4 = inlined_call_operand.vmem [shape: f32[1,128], index: 4, kind: input, shape index: {}]
  %s5 = inlined_call_operand.vmem [shape: f32[32,128], index: 5, kind: output, shape index: {}]
  %s6 = sld [smem:[#allocation0]]
  $region53: #{convblock3_forward.4} parent=0
    _
  %s8 = ssub.s32 1, %s6
  %s9 = scalar_select 0, %s8, %s6
  loop: start=0, step=1, limit=4
  $region2: #{convblock3_forward.4} parent=0 // loop_pre_header
    _
  $region3: #{convblock3_forward.4} parent=0 // loop_header
    %s11 = sphi 0, %s15
    %p12 = scmp.ge.s32.totalorder %s11, 4
    %s21 = sphi 0, %s23
    %s24 = sphi 0, %s21
    %s25 = sphi 0, %s24
    %s41 = sphi 0, %s25
    %s45 = sphi 0, %s45
    %s47 = sphi 0, %s45
    %s48 = sphi 0, %s47
    %s62 = sphi 0, %s48
    %s66 = sphi 0, %s66
    %s68 = sphi 0, %s66
    %s69 = sphi 0, %s68
    %s83 = sphi 0, %s69
    %s87 = sphi 0, %s87
    %s89 = sphi 0, %s87
    %s90 = sphi 0, %s89
    %s104 = sphi 0, %s90
    %s108 = sphi 0, %s108
    %s110 = sphi 0, %s108
    %s111 = sphi 0, %s110
    %s125 = sphi 0, %s111
    %s131 = sphi 0, %s133
    %s134 = sphi 0, %s131
    %s135 = sphi 0, %s134
    %s151 = sphi 0, %s135
  $region4: #{convblock3_forward.4} parent=0 // loop_header_branch
    %14 = sbr.rel (%p12) target = $region8
  $region5: #{convblock3_forward.4} parent=0 // loop_body
    %s16 = ssub.s32 %s11, 1
    %s17 = ssub.s32 %s11, 2
    %s18 = sadd.s32 %s11, 1
    %s19 = ssub.s32 %s11, %s18
    %p20 = scmp.eq.s32.totalorder %s19, 0
    %s22 = sadd.s32 %s21, 1
    %s23 = scalar_select %p20, %s21, %s22
    %p26 = pneg %p20
    %p27 = scmp.eq.s32.totalorder %s11, 1
    %p28 = por %p26, %p27
    %p29 = scmp.ne.s32.totalorder %s21, %s24
    %p30 = scmp.eq.s32.totalorder %s11, 0
    %p31 = por %p29, %p30
    %p32 = scmp.ne.s32.totalorder %s21, %s24
    %p33 = scmp.eq.s32.totalorder %s16, 1
    %p34 = por %p32, %p33
    %p35 = scmp.ne.s32.totalorder %s24, %s25
    %p36 = scmp.eq.s32.totalorder %s16, 0
    %p37 = por %p35, %p36
    %p38 = scmp.ne.s32.totalorder %s24, %s25
    %p39 = scmp.eq.s32.totalorder %s17, 1
    %p40 = por %p38, %p39
    %p42 = scmp.ne.s32.totalorder %s25, %s41
    %p43 = scmp.eq.s32.totalorder %s17, 0
    %p44 = por %p42, %p43
    %s46 = sadd.s32 %s45, 1
    %p49 = scmp.eq.s32.totalorder %s11, 1
    %p50 = scmp.ne.s32.totalorder %s45, %s47
    %p51 = scmp.eq.s32.totalorder %s11, 0
    %p52 = por %p50, %p51
    %p53 = scmp.ne.s32.totalorder %s45, %s47
    %p54 = scmp.eq.s32.totalorder %s16, 1
    %p55 = por %p53, %p54
    %p56 = scmp.ne.s32.totalorder %s47, %s48
    %p57 = scmp.eq.s32.totalorder %s16, 0
    %p58 = por %p56, %p57
    %p59 = scmp.ne.s32.totalorder %s47, %s48
    %p60 = scmp.eq.s32.totalorder %s17, 1
    %p61 = por %p59, %p60
    %p63 = scmp.ne.s32.totalorder %s48, %s62
    %p64 = scmp.eq.s32.totalorder %s17, 0
    %p65 = por %p63, %p64
    %s67 = sadd.s32 %s66, 1
    %p70 = scmp.eq.s32.totalorder %s11, 1
    %p71 = scmp.ne.s32.totalorder %s66, %s68
    %p72 = scmp.eq.s32.totalorder %s11, 0
    %p73 = por %p71, %p72
    %p74 = scmp.ne.s32.totalorder %s66, %s68
    %p75 = scmp.eq.s32.totalorder %s16, 1
    %p76 = por %p74, %p75
    %p77 = scmp.ne.s32.totalorder %s68, %s69
    %p78 = scmp.eq.s32.totalorder %s16, 0
    %p79 = por %p77, %p78
    %p80 = scmp.ne.s32.totalorder %s68, %s69
    %p81 = scmp.eq.s32.totalorder %s17, 1
    %p82 = por %p80, %p81
    %p84 = scmp.ne.s32.totalorder %s69, %s83
    %p85 = scmp.eq.s32.totalorder %s17, 0
    %p86 = por %p84, %p85
    %s88 = sadd.s32 %s87, 1
    %p91 = scmp.eq.s32.totalorder %s11, 1
    %p92 = scmp.ne.s32.totalorder %s87, %s89
    %p93 = scmp.eq.s32.totalorder %s11, 0
    %p94 = por %p92, %p93
    %p95 = scmp.ne.s32.totalorder %s87, %s89
    %p96 = scmp.eq.s32.totalorder %s16, 1
    %p97 = por %p95, %p96
    %p98 = scmp.ne.s32.totalorder %s89, %s90
    %p99 = scmp.eq.s32.totalorder %s16, 0
    %p100 = por %p98, %p99
    %p101 = scmp.ne.s32.totalorder %s89, %s90
    %p102 = scmp.eq.s32.totalorder %s17, 1
    %p103 = por %p101, %p102
    %p105 = scmp.ne.s32.totalorder %s90, %s104
    %p106 = scmp.eq.s32.totalorder %s17, 0
    %p107 = por %p105, %p106
    %s109 = sadd.s32 %s108, 1
    %p112 = scmp.eq.s32.totalorder %s11, 1
    %p113 = scmp.ne.s32.totalorder %s108, %s110
    %p114 = scmp.eq.s32.totalorder %s11, 0
    %p115 = por %p113, %p114
    %p116 = scmp.ne.s32.totalorder %s108, %s110
    %p117 = scmp.eq.s32.totalorder %s16, 1
    %p118 = por %p116, %p117
    %p119 = scmp.ne.s32.totalorder %s110, %s111
    %p120 = scmp.eq.s32.totalorder %s16, 0
    %p121 = por %p119, %p120
    %p122 = scmp.ne.s32.totalorder %s110, %s111
    %p123 = scmp.eq.s32.totalorder %s17, 1
    %p124 = por %p122, %p123
    %p126 = scmp.ne.s32.totalorder %s111, %s125
    %p127 = scmp.eq.s32.totalorder %s17, 0
    %p128 = por %p126, %p127
    %s129 = ssub.s32 %s11, %s18
    %p130 = scmp.eq.s32.totalorder %s129, 0
    %s132 = sadd.s32 %s131, 1
    %s133 = scalar_select %p130, %s131, %s132
    %p136 = pneg %p130
    %p137 = scmp.eq.s32.totalorder %s11, 1
    %p138 = por %p136, %p137
    %p139 = scmp.ne.s32.totalorder %s131, %s134
    %p140 = scmp.eq.s32.totalorder %s11, 0
    %p141 = por %p139, %p140
    %p142 = scmp.ne.s32.totalorder %s131, %s134
    %p143 = scmp.eq.s32.totalorder %s16, 1
    %p144 = por %p142, %p143
    %p145 = scmp.ne.s32.totalorder %s134, %s135
    %p146 = scmp.eq.s32.totalorder %s16, 0
    %p147 = por %p145, %p146
    %p148 = scmp.ne.s32.totalorder %s134, %s135
    %p149 = scmp.eq.s32.totalorder %s17, 1
    %p150 = por %p148, %p149
    %p152 = scmp.ne.s32.totalorder %s135, %s151
    %p153 = scmp.eq.s32.totalorder %s17, 0
    %p154 = por %p152, %p153
    %p155 = scmp.le.s32.totalorder 1, %s11
    %p156 = scmp.lt.s32.totalorder %s11, 3
    %p157 = pnand %p155, %p156
    %p158 = pneg %p157
    // Predicated region
    $region9: #{convblock3_forward.4} parent=5 // pred_check
      _
    $region10: #{convblock3_forward.4} parent=5 // pred_check_branch
      %160 = sbr.rel (%p157) target = $region12
    $region11: #{convblock3_forward.4} parent=5 // pred_region
      %s161 = ssub.s32 %s11, 1
      // Predicated region
      $region13: #{convblock3_forward.4} parent=11 // pred_check
        %p162 = pneg %p58
      $region14: #{convblock3_forward.4} parent=11 // pred_check_branch
        %164 = sbr.rel (%p162) target = $region16
      $region15: #{convblock3_forward.4} parent=11 // pred_region
        _
      $region16: #{convblock3_forward.4} parent=11 // pred_fallthru
        _
      // Predicated region
      $region17: #{convblock3_forward.4} parent=11 // pred_check
        %p165 = pneg %p79
      $region18: #{convblock3_forward.4} parent=11 // pred_check_branch
        %167 = sbr.rel (%p165) target = $region20
      $region19: #{convblock3_forward.4} parent=11 // pred_region
        _
      $region20: #{convblock3_forward.4} parent=11 // pred_fallthru
        _
      // Predicated region
      $region21: #{convblock3_forward.4} parent=11 // pred_check
        %p168 = pneg %p100
      $region22: #{convblock3_forward.4} parent=11 // pred_check_branch
        %170 = sbr.rel (%p168) target = $region24
      $region23: #{convblock3_forward.4} parent=11 // pred_region
        _
      $region24: #{convblock3_forward.4} parent=11 // pred_fallthru
        _
      // Predicated region
      $region25: #{convblock3_forward.4} parent=11 // pred_check
        %p171 = pneg %p121
      $region26: #{convblock3_forward.4} parent=11 // pred_check_branch
        %173 = sbr.rel (%p171) target = $region28
      $region27: #{convblock3_forward.4} parent=11 // pred_region
        _
      $region28: #{convblock3_forward.4} parent=11 // pred_fallthru
        _
    $region12: #{convblock3_forward.4} parent=5 // pred_fallthru
      _
    %p174 = scmp.lt.s32.totalorder %s11, 2
    // Predicated region
    $region29: #{convblock3_forward.4} parent=5 // pred_check
      %p175 = pneg %p174
    $region30: #{convblock3_forward.4} parent=5 // pred_check_branch
      %177 = sbr.rel (%p175) target = $region32
    $region31: #{convblock3_forward.4} parent=5 // pred_region
      // Predicated region
      $region33: #{convblock3_forward.4} parent=31 // pred_check
        %p178 = pneg %p31
      $region34: #{convblock3_forward.4} parent=31 // pred_check_branch
        %180 = sbr.rel (%p178) target = $region36
      $region35: #{convblock3_forward.4} parent=31 // pred_region
        %s181 = smul.u32 2, %s11
        %p182 = scmp.lt.s32.totalorder %s181, 3
        %s183 = scalar_select %p182, %s181, 3
        %s184 = smul.addr %s183, 4
        %s185 = scalar_lea.vmem %s0, %s184
        %s186 = smul.u32 2, %s11
      $region36: #{convblock3_forward.4} parent=31 // pred_fallthru
        _
    $region32: #{convblock3_forward.4} parent=5 // pred_fallthru
      _
    %p187 = scmp.le.s32.totalorder 1, %s11
    %p188 = scmp.lt.s32.totalorder %s11, 3
    %p189 = pnand %p187, %p188
    %p190 = pneg %p189
    // Predicated region
    $region37: #{convblock3_forward.4} parent=5 // pred_check
      _
    $region38: #{convblock3_forward.4} parent=5 // pred_check_branch
      %192 = sbr.rel (%p189) target = $region40
    $region39: #{convblock3_forward.4} parent=5 // pred_region
      %s193 = ssub.s32 %s11, 1
      %s194 = smul.u32 2, %s16
      %p195 = scmp.lt.s32.totalorder %s194, 3
      %s196 = scalar_select %p195, %s194, 3
      %s197 = smul.addr %s196, 4
      %s198 = scalar_lea.vmem %s0, %s197
      %p199 = pneg %p37
      %p200 = pneg %p34
      %p201 = pneg %p58
      %p202 = pneg %p55
      %p203 = pneg %p79
      %p204 = pneg %p76
      %p205 = pneg %p100
      %p206 = pneg %p97
      %p207 = pneg %p121
      %p208 = pneg %p118
      %p209 = pneg %p147
      %p210 = pneg %p144
      %s211 = smul.u32 2, %s16
      %p212 = scmp.lt.s32.totalorder %s211, 3
      %s213 = scalar_select %p212, %s211, 3
      %s214 = smul.addr %s213, 8
      %s215 = scalar_lea.vmem %s5, %s214
      %s216 = smul.u32 2, %s16
      %p217 = scmp.lt.s32.totalorder %s216, 3
      %s218 = scalar_select %p217, %s216, 3
      %s219 = smul.addr %s218, 4
      %s220 = scalar_lea.vmem %s0, %s219
      %s221 = smul.u32 2, %s16
      %s222 = smul.u32 2, %s16
      %p223 = scmp.lt.s32.totalorder %s222, 3
      %s224 = scalar_select %p223, %s222, 3
      %s225 = smul.addr %s224, 8
      %s226 = scalar_lea.vmem %s5, %s225
      %s227 = smul.u32 2, %s16
      %v229 = vld [vmem:[%s220] sm:$0xf]
      %v230 = vld [vmem:[%s220 + $0x4] sm:$0xf]
      %v231 = vld [vmem:[%s1] sm:$0xf]
      %v232 = vld [vmem:[%s1 + $0x4] sm:$0xf]
      %v233 = vld [vmem:[%s1 + $0x8] sm:$0xf]
      %v234 = vld [vmem:[%s1 + $0xc] sm:$0xf]
      %v235 = vld [vmem:[%s1 + $0x10] sm:$0xf]
      %v236 = vld [vmem:[%s1 + $0x14] sm:$0xf]
      %v237 = vld [vmem:[%s1 + $0x18] sm:$0xf]
      %v238 = vld [vmem:[%s1 + $0x1c] sm:$0xf]
      %v239 = vld [vmem:[%s1 + $0x20] sm:$0xf]
      %v240 = vld [vmem:[%s2] sm:$0x1]
      %v242 = vlaneseq
      %v243 = vshrl.u32 %v242, 7
      %v244 = vsub.s32 0, %v243
      %v245 = vrot.slane %v240, %v244
      %v249 = vunpack.c.l.b16 %v229
      %v250 = vunpack.c.l.b16 %v230
      %v251 = vpack.c.b16 %v250, %v249
      %v261 = vunpack.c.l.b16 %v231
      %v262 = vunpack.c.l.b16 %v232
      %v263 = vunpack.c.l.b16 %v233
      %v264 = vunpack.c.l.b16 %v234
      %v265 = vunpack.c.l.b16 %v235
      %v266 = vunpack.c.l.b16 %v236
      %v267 = vunpack.c.l.b16 %v237
      %v268 = vunpack.c.l.b16 %v238
      %v269 = vunpack.c.l.b16 %v239
      %v270 = vpack.c.b16 %v262, %v261
      %v271 = vpack.c.b16 %v264, %v263
      %v272 = vpack.c.b16 %v266, %v265
      %v273 = vpack.c.b16 %v268, %v267
      %v274 = vpack.c.b16 %v269, %v269
      %vm279 = vcmask 588800
      %v281 = vsel %vm279, %v251, 0
      %vm283 = vcmask 1043456
      %v285 = vsel %vm283, %v274, 0
      %287 = vmatprep.subr.bf16.mxu0 0
      %288 = vmatpush1.bf16.msra.mxu0 %v270
      %289 = vmatprep.subr.bf16.mxu0 0
      %290 = vmatpush1.bf16.msra.mxu0 %v271
      %291 = vmatprep.subr.bf16.mxu0 0
      %292 = vmatpush1.bf16.msra.mxu0 %v272
      %293 = vmatprep.subr.bf16.mxu0 0
      %294 = vmatpush1.bf16.msra.mxu0 %v273
      %295 = vmatprep.subr.bf16.mxu0 0
      %296 = vmatpush1.bf16.msra.mxu0 %v285
      %297 = vmatprep.subr.bf16.mxu0 0
      %298 = vmatpush1.bf16.msra.mxu0 0
      %299 = vmatprep.subr.bf16.mxu0 0
      %300 = vmatpush1.bf16.msra.mxu0 0
      %301 = vmatprep.subr.bf16.mxu0 0
      %302 = vmatpush1.bf16.msra.mxu0 0
      %303 = vmatprep.subr.bf16.mxu0 0
      %304 = vmatpush1.bf16.msra.mxu0 0
      %305 = vmatprep.subr.bf16.mxu0 0
      %306 = vmatpush1.bf16.msra.mxu0 0
      %307 = vmatprep.subr.bf16.mxu0 0
      %308 = vmatpush1.bf16.msra.mxu0 0
      %309 = vmatprep.subr.bf16.mxu0 0
      %310 = vmatpush1.bf16.msra.mxu0 0
      %311 = vmatprep.subr.bf16.mxu0 0
      %312 = vmatpush1.bf16.msra.mxu0 0
      %313 = vmatprep.subr.bf16.mxu0 0
      %314 = vmatpush1.bf16.msra.mxu0 0
      %315 = vmatprep.subr.bf16.mxu0 0
      %316 = vmatpush1.bf16.msra.mxu0 0
      %317 = vmatprep.subr.bf16.mxu0 0
      %318 = vmatpush1.bf16.msra.mxu0 0
      %319 = vmatprep.mubr.bf16.mxu0 0
      %320 = vmatmul.mubr.bf16.gmra.mrb[0].mxu0 %v281
      %v321 = vpop.f32.mrb[0].mxu0
      %v322 = vadd.f32 %v245, %v321
      %v323 = vpop.f32.mrb[0].mxu0
      %v324 = vpop.f32.mrb[0].mxu0
      %v325 = vadd.f32 %v245, %v324
      %v326 = vpop.f32.mrb[0].mxu0
      %327 = vdwg.mxu0
      %328 = vadd.xlane.f32.xlu0 %v322
      %v329 = vpop.xlane.xlu0 %328
      %330 = vadd.xlane.f32.xlu0 %v325
      %v331 = vpop.xlane.xlu0 %330
      %v332 = vmul.f32 %v322, %v322
      %v333 = vmul.f32 %v325, %v325
      %334 = vadd.xlane.f32.xlu0 %v332
      %v335 = vpop.xlane.xlu0 %334
      %336 = vadd.xlane.f32.xlu0 %v333
      %v337 = vpop.xlane.xlu0 %336
      %v338 = vmul.f32 %v329, 0.083333336
      %v339 = vmul.f32 %v331, 0.083333336
      %v340 = vmul.f32 %v335, 0.083333336
      %v341 = vmul.f32 %v337, 0.083333336
      %v342 = vmul.f32 %v338, %v338
      %v343 = vmul.f32 %v339, %v339
      %v344 = vsub.f32 %v340, %v342
      %v345 = vsub.f32 %v341, %v343
      %v346 = vmax.f32 %v344, 0.0
      %v347 = vmax.f32 %v345, 0.0
      %v348 = vsub.f32 %v322, %v338
      %v349 = vsub.f32 %v325, %v339
      %v350 = vadd.f32 %v346, 1e-06
      %v351 = vadd.f32 %v347, 1e-06
      %v352 = vrsqrt.pop %v350
      %v353 = vrsqrt.pop %v351
      %v354 = vmul.f32 %v348, %v352
      %v355 = vmul.f32 %v349, %v353
      %v356 = vld [vmem:[%s3] sm:$0x1]
      %v358 = vlaneseq
      %v359 = vshrl.u32 %v358, 7
      %v360 = vsub.s32 0, %v359
      %v361 = vrot.slane %v356, %v360
      %v363 = vmul.f32 %v354, %v361
      %v364 = vmul.f32 %v355, %v361
      %v365 = vld [vmem:[%s4] sm:$0x1]
      %v367 = vlaneseq
      %v368 = vshrl.u32 %v367, 7
      %v369 = vsub.s32 0, %v368
      %v370 = vrot.slane %v365, %v369
      %v372 = vadd.f32 %v363, %v370
      %v373 = vadd.f32 %v364, %v370
      %v374 = vmul.f32 %v372, 0.5
      %v375 = vmul.f32 %v373, 0.5
      %v376 = vmul.f32 %v372, 0.70710677
      %v377 = vmul.f32 %v373, 0.70710677
      %vm378 = vcmp.ge.f32.partialorder %v376, 0.0
      %vm379 = vcmp.ge.f32.partialorder %v377, 0.0
      %v380 = vsel %vm378, 1.0, -1.0
      %v381 = vsel %vm379, 1.0, -1.0
      %v382 = vand.u32 2147483647, %v376
      %v383 = vand.u32 2147483647, %v377
      %v384 = vmul.f32 %v382, 0.3275911
      %v385 = vmul.f32 %v383, 0.3275911
      %v386 = vadd.f32 %v384, 1.0
      %v387 = vadd.f32 %v385, 1.0
      %v388 = vrcp.pop %v386
      %v389 = vrcp.pop %v387
      %v390 = vmul.f32 %v388, 1.0614054
      %v391 = vmul.f32 %v389, 1.0614054
      %v392 = vadd.f32 %v390, -1.4531521
      %v393 = vadd.f32 %v391, -1.4531521
      %v394 = vmul.f32 %v392, %v388
      %v395 = vmul.f32 %v393, %v389
      %v396 = vadd.f32 %v394, 1.4214138
      %v397 = vadd.f32 %v395, 1.4214138
      %v398 = vmul.f32 %v396, %v388
      %v399 = vmul.f32 %v397, %v389
      %v400 = vadd.f32 %v398, -0.28449672
      %v401 = vadd.f32 %v399, -0.28449672
      %v402 = vmul.f32 %v400, %v388
      %v403 = vmul.f32 %v401, %v389
      %v404 = vadd.f32 %v402, 0.2548296
      %v405 = vadd.f32 %v403, 0.2548296
      %v406 = vmul.f32 %v404, %v388
      %v407 = vmul.f32 %v405, %v389
      %v408 = vsub.f32 0.0, %v382
      %v409 = vsub.f32 0.0, %v383
      %v410 = vmul.f32 %v408, %v382
      %v411 = vmul.f32 %v409, %v383
      %v412 = vmul.f32 %v410, 1.442695
      %v413 = vpow.pop %v412
      %v414 = vmul.f32 %v411, 1.442695
      %v415 = vpow.pop %v414
      %v416 = vmul.f32 %v406, %v413
      %v417 = vmul.f32 %v407, %v415
      %v418 = vsub.f32 1.0, %v416
      %v419 = vsub.f32 1.0, %v417
      %v420 = vmul.f32 %v380, %v418
      %v421 = vmul.f32 %v381, %v419
      %v422 = vadd.f32 %v420, 1.0
      %v423 = vadd.f32 %v421, 1.0
      %v424 = vmul.f32 %v374, %v422
      %v425 = vmul.f32 %v375, %v423
      %426 = vst [vmem:[%s226] sm:$0xff] %v424
      %427 = vst [vmem:[%s226 + $0x8] sm:$0xff] %v425
      %s428 = smul.u32 2, %s16
      %p429 = scmp.lt.s32.totalorder %s428, 3
      %s430 = scalar_select %p429, %s428, 3
      %s431 = smul.addr %s430, 8
      %s432 = scalar_lea.vmem %s5, %s431
      // Predicated region
      $region41: #{convblock3_forward.4} parent=39 // pred_check
        %p433 = pneg %p144
      $region42: #{convblock3_forward.4} parent=39 // pred_check_branch
        %435 = sbr.rel (%p433) target = $region44
      $region43: #{convblock3_forward.4} parent=39 // pred_region
        %s436 = smul.u32 2, %s16
      $region44: #{convblock3_forward.4} parent=39 // pred_fallthru
        _
    $region40: #{convblock3_forward.4} parent=5 // pred_fallthru
      _
    %p437 = scmp.le.s32.totalorder 2, %s11
    // Predicated region
    $region45: #{convblock3_forward.4} parent=5 // pred_check
      %p438 = pneg %p437
    $region46: #{convblock3_forward.4} parent=5 // pred_check_branch
      %440 = sbr.rel (%p438) target = $region48
    $region47: #{convblock3_forward.4} parent=5 // pred_region
      %s441 = ssub.s32 %s11, 2
      // Predicated region
      $region49: #{convblock3_forward.4} parent=47 // pred_check
        %p442 = pneg %p150
      $region50: #{convblock3_forward.4} parent=47 // pred_check_branch
        %444 = sbr.rel (%p442) target = $region52
      $region51: #{convblock3_forward.4} parent=47 // pred_region
        %s445 = smul.u32 2, %s17
        %p446 = scmp.lt.s32.totalorder %s445, 3
        %s447 = scalar_select %p446, %s445, 3
        %s448 = smul.addr %s447, 8
        %s449 = scalar_lea.vmem %s5, %s448
      $region52: #{convblock3_forward.4} parent=47 // pred_fallthru
        _
    $region48: #{convblock3_forward.4} parent=5 // pred_fallthru
      _
  $region6: #{convblock3_forward.4} parent=0 // loop_footer
    %s15 = sadd.s32 1, %s11
  $region7: #{convblock3_forward.4} parent=0 // loop_footer_branch
    %10 = sbr.rel target = $region3
  $region8: #{convblock3_forward.4} parent=0 // loop_exit
    _

// kernel: convblock3_forward.5
$region0: #{convblock3_forward.5}
  #allocation0 [shape = 'u32[]', space=smem, size = 0x4, offset = 0x4, fixed_abs, tag = 'smem constant byte address 0x4 - core index']
  #allocation1 [shape = 'u32[144,128]{1,0:T(1,128)}', space=vmem, size = 0x12000, scoped, tag = 'internal scratch']
  %s0 = inlined_call_operand.vmem [shape: bf16[32,108], index: 0, kind: input, shape index: {}]
  %s1 = inlined_call_operand.vmem [shape: bf16[108,128], index: 1, kind: input, shape index: {}]
  %s2 = inlined_call_operand.vmem [shape: f32[1,128], index: 2, kind: input, shape index: {}]
  %s3 = inlined_call_operand.vmem [shape: f32[1,128], index: 3, kind: input, shape index: {}]
  %s4 = inlined_call_operand.vmem [shape: f32[1,128], index: 4, kind: input, shape index: {}]
  %s5 = inlined_call_operand.hbm [shape: f32[32,128], index: 5, kind: output, shape index: {}]
  %s6 = sld [smem:[#allocation0]]
  $region53: #{convblock3_forward.5} parent=0
    _
  %s8 = ssub.s32 1, %s6
  %s9 = scalar_select 0, %s8, %s6
  $region1: #{convblock3_forward.5} parent=0
    #allocation2 [shape = 'u8[16384]{0}', space=vmem, size = 0x4000, scoped, tag = 'output window, operand 0']
    #allocation3 [shape = 's32[2]{0}', space=sflag, size = 0x8, scoped, tag = 'scoped memory for convblock3_forward.5']
    %10 = vsyncpa [#allocation3], 0
    %s11 = scalar_lea.sflag [#allocation3], 1
    %12 = vsyncpa %s11, 0
    loop: start=0, step=1, limit=4
    $region2: #{convblock3_forward.5} parent=1 // loop_pre_header
      _
    $region3: #{convblock3_forward.5} parent=1 // loop_header
      %s14 = sphi 0, %s18
      %p15 = scmp.ge.s32.totalorder %s14, 4
      %s24 = sphi 0, %s26
      %s27 = sphi 0, %s24
      %s28 = sphi 0, %s27
      %s44 = sphi 0, %s28
      %s48 = sphi 0, %s48
      %s50 = sphi 0, %s48
      %s51 = sphi 0, %s50
      %s65 = sphi 0, %s51
      %s69 = sphi 0, %s69
      %s71 = sphi 0, %s69
      %s72 = sphi 0, %s71
      %s86 = sphi 0, %s72
      %s90 = sphi 0, %s90
      %s92 = sphi 0, %s90
      %s93 = sphi 0, %s92
      %s107 = sphi 0, %s93
      %s111 = sphi 0, %s111
      %s113 = sphi 0, %s111
      %s114 = sphi 0, %s113
      %s128 = sphi 0, %s114
      %s134 = sphi 0, %s136
      %s137 = sphi 0, %s134
      %s138 = sphi 0, %s137
      %s154 = sphi 0, %s138
    $region4: #{convblock3_forward.5} parent=1 // loop_header_branch
      %17 = sbr.rel (%p15) target = $region8
    $region5: #{convblock3_forward.5} parent=1 // loop_body
      %s19 = ssub.s32 %s14, 1
      %s20 = ssub.s32 %s14, 2
      %s21 = sadd.s32 %s14, 1
      %s22 = ssub.s32 %s14, %s21
      %p23 = scmp.eq.s32.totalorder %s22, 0
      %s25 = sadd.s32 %s24, 1
      %s26 = scalar_select %p23, %s24, %s25
      %p29 = pneg %p23
      %p30 = scmp.eq.s32.totalorder %s14, 1
      %p31 = por %p29, %p30
      %p32 = scmp.ne.s32.totalorder %s24, %s27
      %p33 = scmp.eq.s32.totalorder %s14, 0
      %p34 = por %p32, %p33
      %p35 = scmp.ne.s32.totalorder %s24, %s27
      %p36 = scmp.eq.s32.totalorder %s19, 1
      %p37 = por %p35, %p36
      %p38 = scmp.ne.s32.totalorder %s27, %s28
      %p39 = scmp.eq.s32.totalorder %s19, 0
      %p40 = por %p38, %p39
      %p41 = scmp.ne.s32.totalorder %s27, %s28
      %p42 = scmp.eq.s32.totalorder %s20, 1
      %p43 = por %p41, %p42
      %p45 = scmp.ne.s32.totalorder %s28, %s44
      %p46 = scmp.eq.s32.totalorder %s20, 0
      %p47 = por %p45, %p46
      %s49 = sadd.s32 %s48, 1
      %p52 = scmp.eq.s32.totalorder %s14, 1
      %p53 = scmp.ne.s32.totalorder %s48, %s50
      %p54 = scmp.eq.s32.totalorder %s14, 0
      %p55 = por %p53, %p54
      %p56 = scmp.ne.s32.totalorder %s48, %s50
      %p57 = scmp.eq.s32.totalorder %s19, 1
      %p58 = por %p56, %p57
      %p59 = scmp.ne.s32.totalorder %s50, %s51
      %p60 = scmp.eq.s32.totalorder %s19, 0
      %p61 = por %p59, %p60
      %p62 = scmp.ne.s32.totalorder %s50, %s51
      %p63 = scmp.eq.s32.totalorder %s20, 1
      %p64 = por %p62, %p63
      %p66 = scmp.ne.s32.totalorder %s51, %s65
      %p67 = scmp.eq.s32.totalorder %s20, 0
      %p68 = por %p66, %p67
      %s70 = sadd.s32 %s69, 1
      %p73 = scmp.eq.s32.totalorder %s14, 1
      %p74 = scmp.ne.s32.totalorder %s69, %s71
      %p75 = scmp.eq.s32.totalorder %s14, 0
      %p76 = por %p74, %p75
      %p77 = scmp.ne.s32.totalorder %s69, %s71
      %p78 = scmp.eq.s32.totalorder %s19, 1
      %p79 = por %p77, %p78
      %p80 = scmp.ne.s32.totalorder %s71, %s72
      %p81 = scmp.eq.s32.totalorder %s19, 0
      %p82 = por %p80, %p81
      %p83 = scmp.ne.s32.totalorder %s71, %s72
      %p84 = scmp.eq.s32.totalorder %s20, 1
      %p85 = por %p83, %p84
      %p87 = scmp.ne.s32.totalorder %s72, %s86
      %p88 = scmp.eq.s32.totalorder %s20, 0
      %p89 = por %p87, %p88
      %s91 = sadd.s32 %s90, 1
      %p94 = scmp.eq.s32.totalorder %s14, 1
      %p95 = scmp.ne.s32.totalorder %s90, %s92
      %p96 = scmp.eq.s32.totalorder %s14, 0
      %p97 = por %p95, %p96
      %p98 = scmp.ne.s32.totalorder %s90, %s92
      %p99 = scmp.eq.s32.totalorder %s19, 1
      %p100 = por %p98, %p99
      %p101 = scmp.ne.s32.totalorder %s92, %s93
      %p102 = scmp.eq.s32.totalorder %s19, 0
      %p103 = por %p101, %p102
      %p104 = scmp.ne.s32.totalorder %s92, %s93
      %p105 = scmp.eq.s32.totalorder %s20, 1
      %p106 = por %p104, %p105
      %p108 = scmp.ne.s32.totalorder %s93, %s107
      %p109 = scmp.eq.s32.totalorder %s20, 0
      %p110 = por %p108, %p109
      %s112 = sadd.s32 %s111, 1
      %p115 = scmp.eq.s32.totalorder %s14, 1
      %p116 = scmp.ne.s32.totalorder %s111, %s113
      %p117 = scmp.eq.s32.totalorder %s14, 0
      %p118 = por %p116, %p117
      %p119 = scmp.ne.s32.totalorder %s111, %s113
      %p120 = scmp.eq.s32.totalorder %s19, 1
      %p121 = por %p119, %p120
      %p122 = scmp.ne.s32.totalorder %s113, %s114
      %p123 = scmp.eq.s32.totalorder %s19, 0
      %p124 = por %p122, %p123
      %p125 = scmp.ne.s32.totalorder %s113, %s114
      %p126 = scmp.eq.s32.totalorder %s20, 1
      %p127 = por %p125, %p126
      %p129 = scmp.ne.s32.totalorder %s114, %s128
      %p130 = scmp.eq.s32.totalorder %s20, 0
      %p131 = por %p129, %p130
      %s132 = ssub.s32 %s14, %s21
      %p133 = scmp.eq.s32.totalorder %s132, 0
      %s135 = sadd.s32 %s134, 1
      %s136 = scalar_select %p133, %s134, %s135
      %p139 = pneg %p133
      %p140 = scmp.eq.s32.totalorder %s14, 1
      %p141 = por %p139, %p140
      %p142 = scmp.ne.s32.totalorder %s134, %s137
      %p143 = scmp.eq.s32.totalorder %s14, 0
      %p144 = por %p142, %p143
      %p145 = scmp.ne.s32.totalorder %s134, %s137
      %p146 = scmp.eq.s32.totalorder %s19, 1
      %p147 = por %p145, %p146
      %p148 = scmp.ne.s32.totalorder %s137, %s138
      %p149 = scmp.eq.s32.totalorder %s19, 0
      %p150 = por %p148, %p149
      %p151 = scmp.ne.s32.totalorder %s137, %s138
      %p152 = scmp.eq.s32.totalorder %s20, 1
      %p153 = por %p151, %p152
      %p155 = scmp.ne.s32.totalorder %s138, %s154
      %p156 = scmp.eq.s32.totalorder %s20, 0
      %p157 = por %p155, %p156
      %p158 = scmp.le.s32.totalorder 1, %s14
      %p159 = scmp.lt.s32.totalorder %s14, 3
      %p160 = pnand %p158, %p159
      %p161 = pneg %p160
      // Predicated region
      $region9: #{convblock3_forward.5} parent=5 // pred_check
        _
      $region10: #{convblock3_forward.5} parent=5 // pred_check_branch
        %163 = sbr.rel (%p160) target = $region12
      $region11: #{convblock3_forward.5} parent=5 // pred_region
        %s164 = ssub.s32 %s14, 1
        // Predicated region
        $region13: #{convblock3_forward.5} parent=11 // pred_check
          %p165 = pneg %p61
        $region14: #{convblock3_forward.5} parent=11 // pred_check_branch
          %167 = sbr.rel (%p165) target = $region16
        $region15: #{convblock3_forward.5} parent=11 // pred_region
          _
        $region16: #{convblock3_forward.5} parent=11 // pred_fallthru
          _
        // Predicated region
        $region17: #{convblock3_forward.5} parent=11 // pred_check
          %p168 = pneg %p82
        $region18: #{convblock3_forward.5} parent=11 // pred_check_branch
          %170 = sbr.rel (%p168) target = $region20
        $region19: #{convblock3_forward.5} parent=11 // pred_region
          _
        $region20: #{convblock3_forward.5} parent=11 // pred_fallthru
          _
        // Predicated region
        $region21: #{convblock3_forward.5} parent=11 // pred_check
          %p171 = pneg %p103
        $region22: #{convblock3_forward.5} parent=11 // pred_check_branch
          %173 = sbr.rel (%p171) target = $region24
        $region23: #{convblock3_forward.5} parent=11 // pred_region
          _
        $region24: #{convblock3_forward.5} parent=11 // pred_fallthru
          _
        // Predicated region
        $region25: #{convblock3_forward.5} parent=11 // pred_check
          %p174 = pneg %p124
        $region26: #{convblock3_forward.5} parent=11 // pred_check_branch
          %176 = sbr.rel (%p174) target = $region28
        $region27: #{convblock3_forward.5} parent=11 // pred_region
          _
        $region28: #{convblock3_forward.5} parent=11 // pred_fallthru
          _
      $region12: #{convblock3_forward.5} parent=5 // pred_fallthru
        _
      %p177 = scmp.lt.s32.totalorder %s14, 2
      // Predicated region
      $region29: #{convblock3_forward.5} parent=5 // pred_check
        %p178 = pneg %p177
      $region30: #{convblock3_forward.5} parent=5 // pred_check_branch
        %180 = sbr.rel (%p178) target = $region32
      $region31: #{convblock3_forward.5} parent=5 // pred_region
        // Predicated region
        $region33: #{convblock3_forward.5} parent=31 // pred_check
          %p181 = pneg %p34
        $region34: #{convblock3_forward.5} parent=31 // pred_check_branch
          %183 = sbr.rel (%p181) target = $region36
        $region35: #{convblock3_forward.5} parent=31 // pred_region
          %s184 = smul.u32 2, %s14
          %p185 = scmp.lt.s32.totalorder %s184, 3
          %s186 = scalar_select %p185, %s184, 3
          %s187 = smul.addr %s186, 4
          %s188 = scalar_lea.vmem %s0, %s187
          %s189 = smul.u32 2, %s14
        $region36: #{convblock3_forward.5} parent=31 // pred_fallthru
          _
      $region32: #{convblock3_forward.5} parent=5 // pred_fallthru
        _
      %p190 = scmp.le.s32.totalorder 1, %s14
      %p191 = scmp.lt.s32.totalorder %s14, 3
      %p192 = pnand %p190, %p191
      %p193 = pneg %p192
      // Predicated region
      $region37: #{convblock3_forward.5} parent=5 // pred_check
        _
      $region38: #{convblock3_forward.5} parent=5 // pred_check_branch
        %195 = sbr.rel (%p192) target = $region40
      $region39: #{convblock3_forward.5} parent=5 // pred_region
        %s196 = ssub.s32 %s14, 1
        %s197 = smul.u32 2, %s19
        %p198 = scmp.lt.s32.totalorder %s197, 3
        %s199 = scalar_select %p198, %s197, 3
        %s200 = smul.addr %s199, 4
        %s201 = scalar_lea.vmem %s0, %s200
        %p202 = pneg %p40
        %p203 = pneg %p37
        %p204 = pneg %p61
        %p205 = pneg %p58
        %p206 = pneg %p82
        %p207 = pneg %p79
        %p208 = pneg %p103
        %p209 = pneg %p100
        %p210 = pneg %p124
        %p211 = pneg %p121
        %p212 = pneg %p150
        %p213 = pneg %p147
        %s214 = sand.u32 %s137, 1
        %s215 = scalar_lea.sflag [#allocation3], %s214
        %s216 = sand.u32 %s137, 1
        %s217 = smul.addr %s216, 16
        %s218 = scalar_lea.vmem [#allocation2], %s217
        %s219 = smul.u32 2, %s19
        %p220 = scmp.lt.s32.totalorder %s219, 3
        %s221 = scalar_select %p220, %s219, 3
        %s222 = smul.addr %s221, 4
        %s223 = scalar_lea.vmem %s0, %s222
        %s224 = smul.u32 2, %s19
        %s225 = smul.u32 2, %s19
        %v227 = vld [vmem:[%s223] sm:$0xf]
        %v228 = vld [vmem:[%s223 + $0x4] sm:$0xf]
        %v229 = vld [vmem:[%s1] sm:$0xf]
        %v230 = vld [vmem:[%s1 + $0x4] sm:$0xf]
        %v231 = vld [vmem:[%s1 + $0x8] sm:$0xf]
        %v232 = vld [vmem:[%s1 + $0xc] sm:$0xf]
        %v233 = vld [vmem:[%s1 + $0x10] sm:$0xf]
        %v234 = vld [vmem:[%s1 + $0x14] sm:$0xf]
        %v235 = vld [vmem:[%s1 + $0x18] sm:$0xf]
        %v236 = vld [vmem:[%s1 + $0x1c] sm:$0xf]
        %v237 = vld [vmem:[%s1 + $0x20] sm:$0xf]
        %v238 = vld [vmem:[%s1 + $0x24] sm:$0xf]
        %v239 = vld [vmem:[%s1 + $0x28] sm:$0xf]
        %v240 = vld [vmem:[%s1 + $0x2c] sm:$0xf]
        %v241 = vld [vmem:[%s1 + $0x30] sm:$0xf]
        %v242 = vld [vmem:[%s1 + $0x34] sm:$0x3]
        %v243 = vld [vmem:[%s2] sm:$0x1]
        %v245 = vlaneseq
        %v246 = vshrl.u32 %v245, 7
        %v247 = vsub.s32 0, %v246
        %v248 = vrot.slane %v243, %v247
        %v252 = vunpack.c.l.b16 %v227
        %v253 = vunpack.c.l.b16 %v228
        %v254 = vpack.c.b16 %v253, %v252
        %v269 = vunpack.c.l.b16 %v229
        %v270 = vunpack.c.l.b16 %v230
        %v271 = vunpack.c.l.b16 %v231
        %v272 = vunpack.c.l.b16 %v232
        %v273 = vunpack.c.l.b16 %v233
        %v274 = vunpack.c.l.b16 %v234
        %v275 = vunpack.c.l.b16 %v235
        %v276 = vunpack.c.l.b16 %v236
        %v277 = vunpack.c.l.b16 %v237
        %v278 = vunpack.c.l.b16 %v238
        %v279 = vunpack.c.l.b16 %v239
        %v280 = vunpack.c.l.b16 %v240
        %v281 = vunpack.c.l.b16 %v241
        %v282 = vunpack.c.l.b16 %v242
        %v283 = vpack.c.b16 %v270, %v269
        %v284 = vpack.c.b16 %v272, %v271
        %v285 = vpack.c.b16 %v274, %v273
        %v286 = vpack.c.b16 %v276, %v275
        %v287 = vpack.c.b16 %v278, %v277
        %v288 = vpack.c.b16 %v280, %v279
        %v289 = vpack.c.b16 %v282, %v281
        %vm296 = vcmask 883712
        %v298 = vsel %vm296, %v254, 0
        %vm300 = vcmask 1045504
        %v302 = vsel %vm300, %v289, 0
        %304 = vmatprep.subr.bf16.mxu0 0
        %305 = vmatpush1.bf16.msra.mxu0 %v283
        %306 = vmatprep.subr.bf16.mxu0 0
        %307 = vmatpush1.bf16.msra.mxu0 %v284
        %308 = vmatprep.subr.bf16.mxu0 0
        %309 = vmatpush1.bf16.msra.mxu0 %v285
        %310 = vmatprep.subr.bf16.mxu0 0
        %311 = vmatpush1.bf16.msra.mxu0 %v286
        %312 = vmatprep.subr.bf16.mxu0 0
        %313 = vmatpush1.bf16.msra.mxu0 %v287
        %314 = vmatprep.subr.bf16.mxu0 0
        %315 = vmatpush1.bf16.msra.mxu0 %v288
        %316 = vmatprep.subr.bf16.mxu0 0
        %317 = vmatpush1.bf16.msra.mxu0 %v302
        %318 = vmatprep.subr.bf16.mxu0 0
        %319 = vmatpush1.bf16.msra.mxu0 0
        %320 = vmatprep.subr.bf16.mxu0 0
        %321 = vmatpush1.bf16.msra.mxu0 0
        %322 = vmatprep.subr.bf16.mxu0 0
        %323 = vmatpush1.bf16.msra.mxu0 0
        %324 = vmatprep.subr.bf16.mxu0 0
        %325 = vmatpush1.bf16.msra.mxu0 0
        %326 = vmatprep.subr.bf16.mxu0 0
        %327 = vmatpush1.bf16.msra.mxu0 0
        %328 = vmatprep.subr.bf16.mxu0 0
        %329 = vmatpush1.bf16.msra.mxu0 0
        %330 = vmatprep.subr.bf16.mxu0 0
        %331 = vmatpush1.bf16.msra.mxu0 0
        %332 = vmatprep.subr.bf16.mxu0 0
        %333 = vmatpush1.bf16.msra.mxu0 0
        %334 = vmatprep.subr.bf16.mxu0 0
        %335 = vmatpush1.bf16.msra.mxu0 0
        %336 = vmatprep.mubr.bf16.mxu0 0
        %337 = vmatmul.mubr.bf16.gmra.mrb[0].mxu0 %v298
        %v338 = vpop.f32.mrb[0].mxu0
        %v339 = vadd.f32 %v248, %v338
        %v340 = vpop.f32.mrb[0].mxu0
        %v341 = vpop.f32.mrb[0].mxu0
        %v342 = vadd.f32 %v248, %v341
        %v343 = vpop.f32.mrb[0].mxu0
        %344 = vdwg.mxu0
        %345 = vadd.xlane.f32.xlu0 %v339
        %v346 = vpop.xlane.xlu0 %345
        %347 = vadd.xlane.f32.xlu0 %v342
        %v348 = vpop.xlane.xlu0 %347
        %v349 = vmul.f32 %v339, %v339
        %v350 = vmul.f32 %v342, %v342
        %351 = vadd.xlane.f32.xlu0 %v349
        %v352 = vpop.xlane.xlu0 %351
        %353 = vadd.xlane.f32.xlu0 %v350
        %v354 = vpop.xlane.xlu0 %353
        %v355 = vmul.f32 %v346, 0.0625
        %v356 = vmul.f32 %v348, 0.0625
        %v357 = vmul.f32 %v352, 0.0625
        %v358 = vmul.f32 %v354, 0.0625
        %v359 = vmul.f32 %v355, %v355
        %v360 = vmul.f32 %v356, %v356
        %v361 = vsub.f32 %v357, %v359
        %v362 = vsub.f32 %v358, %v360
        %v363 = vmax.f32 %v361, 0.0
        %v364 = vmax.f32 %v362, 0.0
        %v365 = vsub.f32 %v339, %v355
        %v366 = vsub.f32 %v342, %v356
        %v367 = vadd.f32 %v363, 1e-06
        %v368 = vadd.f32 %v364, 1e-06
        %v369 = vrsqrt.pop %v367
        %v370 = vrsqrt.pop %v368
        %v371 = vmul.f32 %v365, %v369
        %v372 = vmul.f32 %v366, %v370
        %v373 = vld [vmem:[%s3] sm:$0x1]
        %v375 = vlaneseq
        %v376 = vshrl.u32 %v375, 7
        %v377 = vsub.s32 0, %v376
        %v378 = vrot.slane %v373, %v377
        %v380 = vmul.f32 %v371, %v378
        %v381 = vmul.f32 %v372, %v378
        %v382 = vld [vmem:[%s4] sm:$0x1]
        %v384 = vlaneseq
        %v385 = vshrl.u32 %v384, 7
        %v386 = vsub.s32 0, %v385
        %v387 = vrot.slane %v382, %v386
        %v389 = vadd.f32 %v380, %v387
        %v390 = vadd.f32 %v381, %v387
        %v391 = vmul.f32 %v389, 0.5
        %v392 = vmul.f32 %v390, 0.5
        %v393 = vmul.f32 %v389, 0.70710677
        %v394 = vmul.f32 %v390, 0.70710677
        %vm395 = vcmp.ge.f32.partialorder %v393, 0.0
        %vm396 = vcmp.ge.f32.partialorder %v394, 0.0
        %v397 = vsel %vm395, 1.0, -1.0
        %v398 = vsel %vm396, 1.0, -1.0
        %v399 = vand.u32 2147483647, %v393
        %v400 = vand.u32 2147483647, %v394
        %v401 = vmul.f32 %v399, 0.3275911
        %v402 = vmul.f32 %v400, 0.3275911
        %v403 = vadd.f32 %v401, 1.0
        %v404 = vadd.f32 %v402, 1.0
        %v405 = vrcp.pop %v403
        %v406 = vrcp.pop %v404
        %v407 = vmul.f32 %v405, 1.0614054
        %v408 = vmul.f32 %v406, 1.0614054
        %v409 = vadd.f32 %v407, -1.4531521
        %v410 = vadd.f32 %v408, -1.4531521
        %v411 = vmul.f32 %v409, %v405
        %v412 = vmul.f32 %v410, %v406
        %v413 = vadd.f32 %v411, 1.4214138
        %v414 = vadd.f32 %v412, 1.4214138
        %v415 = vmul.f32 %v413, %v405
        %v416 = vmul.f32 %v414, %v406
        %v417 = vadd.f32 %v415, -0.28449672
        %v418 = vadd.f32 %v416, -0.28449672
        %v419 = vmul.f32 %v417, %v405
        %v420 = vmul.f32 %v418, %v406
        %v421 = vadd.f32 %v419, 0.2548296
        %v422 = vadd.f32 %v420, 0.2548296
        %v423 = vmul.f32 %v421, %v405
        %v424 = vmul.f32 %v422, %v406
        %v425 = vsub.f32 0.0, %v399
        %v426 = vsub.f32 0.0, %v400
        %v427 = vmul.f32 %v425, %v399
        %v428 = vmul.f32 %v426, %v400
        %v429 = vmul.f32 %v427, 1.442695
        %v430 = vpow.pop %v429
        %v431 = vmul.f32 %v428, 1.442695
        %v432 = vpow.pop %v431
        %v433 = vmul.f32 %v423, %v430
        %v434 = vmul.f32 %v424, %v432
        %v435 = vsub.f32 1.0, %v433
        %v436 = vsub.f32 1.0, %v434
        %v437 = vmul.f32 %v397, %v435
        %v438 = vmul.f32 %v398, %v436
        %v439 = vadd.f32 %v437, 1.0
        %v440 = vadd.f32 %v438, 1.0
        %v441 = vmul.f32 %v391, %v439
        %v442 = vmul.f32 %v392, %v440
        %443 = vst [vmem:[%s218] sm:$0xff] %v441
        %444 = vst [vmem:[%s218 + $0x8] sm:$0xff] %v442
        %s445 = sand.u32 %s137, 1
        %s446 = scalar_lea.sflag [#allocation3], %s445
        %s447 = sand.u32 %s137, 1
        %s448 = smul.addr %s447, 16
        %s449 = scalar_lea.vmem [#allocation2], %s448
        // Predicated region
        $region41: #{convblock3_forward.5} parent=39 // pred_check
          %p450 = pneg %p147
        $region42: #{convblock3_forward.5} parent=39 // pred_check_branch
          %452 = sbr.rel (%p450) target = $region44
        $region43: #{convblock3_forward.5} parent=39 // pred_region
          %s453 = smul.u32 2, %s19
          %s455 = ssub.s32 256, 256
          %456 = vsyncadd %s446, %s455
          %s457 = smul.addr %s453, 128
          %s458 = scalar_lea.hbm %s5, %s457
          %s459 = sshll.u32 %s449, 4
          %s460 = int_to_ptr.vmem [resolvable:$true] %s459
          %465 = dma.vmem_to_hbm [thread:$0]  %s460, 256, %s458, %s446, 128, 128, 8
        $region44: #{convblock3_forward.5} parent=39 // pred_fallthru
          _
      $region40: #{convblock3_forward.5} parent=5 // pred_fallthru
        _
      %p466 = scmp.le.s32.totalorder 2, %s14
      // Predicated region
      $region45: #{convblock3_forward.5} parent=5 // pred_check
        %p467 = pneg %p466
      $region46: #{convblock3_forward.5} parent=5 // pred_check_branch
        %469 = sbr.rel (%p467) target = $region48
      $region47: #{convblock3_forward.5} parent=5 // pred_region
        %s470 = ssub.s32 %s14, 2
        // Predicated region
        $region49: #{convblock3_forward.5} parent=47 // pred_check
          %p471 = pneg %p153
        $region50: #{convblock3_forward.5} parent=47 // pred_check_branch
          %473 = sbr.rel (%p471) target = $region52
        $region51: #{convblock3_forward.5} parent=47 // pred_region
          %s474 = sand.u32 %s138, 1
          %s475 = scalar_lea.sflag [#allocation3], %s474
          %s476 = sand.u32 %s138, 1
          %s477 = smul.addr %s476, 16
          %s478 = scalar_lea.vmem [#allocation2], %s477
          %479 = dma.done %s475, 256
        $region52: #{convblock3_forward.5} parent=47 // pred_fallthru
          _
      $region48: #{convblock3_forward.5} parent=5 // pred_fallthru
        _
    $region6: #{convblock3_forward.5} parent=1 // loop_footer
      %s18 = sadd.s32 1, %s14
    $region7: #{convblock3_forward.5} parent=1 // loop_footer_branch
      %13 = sbr.rel target = $region3
    $region8: #{convblock3_forward.5} parent=1 // loop_exit
      _
    %480 = vsyncpa [#allocation3], 1
    %s481 = scalar_lea.sflag [#allocation3], 1
    %482 = vsyncpa %s481, 1

</llo_original>
